<compile_context>
chip_gen: v5e
topology: v5e:2x2
jax: 0.10.0
libtpu: 0.0.40
codegen_flags: <defaults>
</compile_context>

<pallas_src>
import functools
import math

import jax
import jax.numpy as jnp
from jax import lax
from jax.experimental import pallas as pl
from jax.experimental.pallas import tpu as pltpu

_MIB = 1024 * 1024


def _layer_norm(x, w2d, b2d, eps):
    # Two-pass variance: numerically robust when |mean| >> std (post-residual).
    mean = jnp.mean(x, axis=-1, keepdims=True)
    xc = x - mean
    var = jnp.mean(xc * xc, axis=-1, keepdims=True)
    return xc * lax.rsqrt(var + eps) * w2d + b2d


def encoder_layer_kernel(xf_ref,
                         wq_ref, bq_ref, wkv_ref, bkv_ref,
                         wo_ref, bo_ref,
                         ln1_w_ref, ln1_b_ref, ln2_w_ref, ln2_b_ref,
                         w1t_ref, b1_ref, w2t_ref, b2_ref,
                         o_ref,
                         k_scratch, v_scratch, attn_scratch,
                         *, nhead, eps):
    D = xf_ref.shape[-1]
    hd = D // nhead
    tq = o_ref.shape[1]
    scale = 1.0 / math.sqrt(hd)
    qi = pl.program_id(1)

    # ---- fused K/V projection for the full sequence, computed once per batch
    # element (first q-tile) and cached in bf16 VMEM scratch across q-tiles.
    # Correct only because the q-tile axis is "arbitrary" (sequential). ----
    # TODO(synk): for v7x dual-TC use / very long S, hoist this projection out
    # of the kernel (or KV-chunk the attention flash-style) so the q axis can
    # be marked "parallel" and VMEM stops scaling with S.
    @pl.when(qi == 0)
    def _():
        xf = xf_ref[0].astype(jnp.bfloat16)                        # (S, D)
        kv = jnp.dot(xf, wkv_ref[...],
                     preferred_element_type=jnp.float32) + bkv_ref[...]
        k_scratch[...] = kv[:, :D].astype(jnp.bfloat16)
        v_scratch[...] = kv[:, D:].astype(jnp.bfloat16)

    # q-tile sliced out of the already-resident full-sequence block:
    # x is DMA'd from HBM exactly once per batch element.
    row0 = pl.multiple_of(qi * tq, tq)
    xq = xf_ref[0, pl.ds(row0, tq), :]                             # (TQ, D) f32

    # Q projection; fold 1/sqrt(hd) into q (cheaper than scaling (TQ, S)).
    q = jnp.dot(xq.astype(jnp.bfloat16), wq_ref[...],
                preferred_element_type=jnp.float32) + bq_ref[...]
    q = (q * scale).astype(jnp.bfloat16)                           # (TQ, D)

    k = k_scratch[...]                                             # (S, D) bf16
    v = v_scratch[...]                                             # (S, D) bf16

    # ---- attention: per-head softmax; head outputs written at their lane
    # offsets into a (TQ, D) bf16 scratch, then ONE full-width (K=D) output
    # projection (keeps the 256-wide MXU contraction dense on v6e/v7x). ----
    # TODO(synk): for nhead >= 8 switch the static loop to lax.fori_loop
    # (unroll=2..4) to bound vreg live ranges.
    # TODO(synk): on v6e/v7x the exp could run in bf16 for 2x EUP throughput
    # (v5e has no bf16 EUP path, so kept in f32 here).
    for h in range(nhead):                                         # static loop
        sl = slice(h * hd, (h + 1) * hd)
        qh = q[:, sl]
        kh = k[:, sl]
        vh = v[:, sl]
        sc = lax.dot_general(qh, kh, (((1,), (1,)), ((), ())),
                             preferred_element_type=jnp.float32)   # (TQ, S)
        sc = sc - jnp.max(sc, axis=-1, keepdims=True)
        p = jnp.exp(sc)
        p = p * pl.reciprocal(jnp.sum(p, axis=-1, keepdims=True), approx=True)
        oh = jnp.dot(p.astype(jnp.bfloat16), vh,
                     preferred_element_type=jnp.float32)           # (TQ, hd)
        attn_scratch[:, sl] = oh.astype(jnp.bfloat16)

    attn = jnp.dot(attn_scratch[...], wo_ref[...],
                   preferred_element_type=jnp.float32) + bo_ref[...]

    # dropout1 = identity (eval semantics); post-norm (norm_first=False)
    x1 = _layer_norm(xq + attn, ln1_w_ref[...], ln1_b_ref[...], eps)

    # ---- feed-forward (relu) ----
    h1 = jnp.dot(x1.astype(jnp.bfloat16), w1t_ref[...],
                 preferred_element_type=jnp.float32) + b1_ref[...]
    h1 = jnp.maximum(h1, 0.0)
    ff = jnp.dot(h1.astype(jnp.bfloat16), w2t_ref[...],
                 preferred_element_type=jnp.float32) + b2_ref[...]

    # dropout2 = identity (eval semantics)
    x2 = _layer_norm(x1 + ff, ln2_w_ref[...], ln2_b_ref[...], eps)
    o_ref[0, :, :] = x2.astype(o_ref.dtype)


def _vmem_capacity_bytes():
    try:
        info = pltpu.get_tpu_info()
        cap = getattr(info, "vmem_capacity_bytes", None)
        if cap:
            return int(cap)
    except Exception:
        pass
    return 64 * _MIB  # conservative default (v7x per-TC VMEM)


def _choose_tq(S, vmem_cap):
    # Generation-aware: 128 MiB parts (v5e/v6e) can afford wider q-tiles;
    # keep TQ <= 256 on 64 MiB parts (v7x).
    cands = (512, 256, 128) if vmem_cap >= 96 * _MIB else (256, 128)
    for t in cands:
        if t <= S and S % t == 0:
            return t
    return S  # fallback: single tile covering the whole sequence


def transformer_encoder_layer(src, params, *, nhead, eps=1e-5):
    """src: (S, B, D) float32 (PyTorch batch_first=False layout)."""
    S, B, D = src.shape
    dff = params["w1"].shape[0]
    x = jnp.transpose(src, (1, 0, 2))                              # (B, S, D)

    # Pre-split / pre-transpose projection weights, cast to bf16 (native MXU
    # dtype; halves weight DMA + VMEM).  K/V weights and biases are fused so
    # the per-batch K/V projection is a single (S,D)@(D,2D) matmul.
    bf = jnp.bfloat16
    in_w, in_b = params["in_w"], params["in_b"]
    wq = in_w[0 * D:1 * D].T.astype(bf)                            # (D, D)
    wkv = in_w[1 * D:3 * D].T.astype(bf)                           # (D, 2D) [K|V]
    bq = in_b[None, 0 * D:1 * D]                                   # (1, D) f32
    bkv = in_b[None, 1 * D:3 * D]                                  # (1, 2D)
    wo = params["out_w"].T.astype(bf)                              # (D, D)
    bo = params["out_b"][None, :]
    w1t = params["w1"].T.astype(bf)                                # (D, dff)
    w2t = params["w2"].T.astype(bf)                                # (dff, D)
    b1 = params["b1"][None, :]
    b2 = params["b2"][None, :]
    ln1_w = params["ln1_w"][None, :]
    ln1_b = params["ln1_b"][None, :]
    ln2_w = params["ln2_w"][None, :]
    ln2_b = params["ln2_b"][None, :]

    vmem_cap = _vmem_capacity_bytes()
    TQ = _choose_tq(S, vmem_cap)
    nq = S // TQ

    # Constant-index operands are fetched once -> single-buffer them
    # (pipeline_mode=Buffered(1)); halves weight VMEM with no perf cost.
    def const_spec(shape):
        zeros = (0,) * len(shape)
        return pl.BlockSpec(shape, lambda b_, q_: zeros,
                            pipeline_mode=pl.Buffered(1))

    in_specs = [
        # x: full sequence per batch element (single DMA; q-tiles are sliced
        # out of this resident block inside the kernel).
        pl.BlockSpec((1, S, D), lambda b_, q_: (b_, 0, 0)),
        const_spec((D, D)), const_spec((1, D)),                    # wq, bq
        const_spec((D, 2 * D)), const_spec((1, 2 * D)),            # wkv, bkv
        const_spec((D, D)), const_spec((1, D)),                    # wo, bo
        const_spec((1, D)), const_spec((1, D)),                    # ln1 w/b
        const_spec((1, D)), const_spec((1, D)),                    # ln2 w/b
        const_spec((D, dff)), const_spec((1, dff)),                # w1t, b1
        const_spec((dff, D)), const_spec((1, D)),                  # w2t, b2
    ]

    # Advisory cost hint for XLA's scheduler.
    flops = B * (8 * S * D * D + 4 * S * S * D + 4 * S * D * dff)
    transcendentals = B * nhead * S * S
    weight_bytes = (4 * D * D + 2 * D * dff) * 2 + (9 * D + dff) * 4
    bytes_accessed = 2 * B * S * D * 4 + weight_bytes              # x in + out + weights
    cost = pl.CostEstimate(flops=int(flops),
                           transcendentals=int(transcendentals),
                           bytes_accessed=int(bytes_accessed))

    # Scoped-VMEM budget: single-buffered weights + double-buffered x/out
    # blocks + K/V/head-concat scratch + live f32 temporaries, capped below
    # the physical capacity of the current generation.
    act_bytes = (2 * S * D * 4            # x block (double-buffered)
                 + 2 * S * D * 2          # K/V scratch (bf16)
                 + TQ * D * 2             # head-concat scratch (bf16)
                 + 2 * TQ * D * 4         # output block (double-buffered)
                 + 4 * (3 * TQ * S + 2 * TQ * dff + 8 * TQ * D))
    vmem_limit = int(min(vmem_cap - 8 * _MIB, 112 * _MIB,
                         max(32 * _MIB, 2 * (weight_bytes + act_bytes))))

    out = pl.pallas_call(
        functools.partial(encoder_layer_kernel, nhead=nhead, eps=eps),
        out_shape=jax.ShapeDtypeStruct((B, S, D), src.dtype),
        grid=(B, nq),
        in_specs=in_specs,
        out_specs=pl.BlockSpec((1, TQ, D), lambda b_, q_: (b_, q_, 0)),
        scratch_shapes=[pltpu.VMEM((S, D), jnp.bfloat16),          # K cache
                        pltpu.VMEM((S, D), jnp.bfloat16),          # V cache
                        pltpu.VMEM((TQ, D), jnp.bfloat16)],        # head concat
        compiler_params=pltpu.CompilerParams(
            dimension_semantics=("parallel", "arbitrary"),
            vmem_limit_bytes=vmem_limit),
        cost_estimate=cost,
    )(x, wq, bq, wkv, bkv, wo, bo,
      ln1_w, ln1_b, ln2_w, ln2_b, w1t, b1, w2t, b2)

    return jnp.transpose(out, (1, 0, 2))                           # back to (S, B, D)


# ---------------- pure-JAX f32 reference (for sanity check) ----------------
def reference(src, params, *, nhead, eps=1e-5):
    S, B, D = src.shape
    hd = D // nhead
    x = jnp.transpose(src, (1, 0, 2)).astype(jnp.float32)          # (B, S, D)

    def ln(y, w, b):
        m = jnp.mean(y, -1, keepdims=True)
        v = jnp.mean((y - m) ** 2, -1, keepdims=True)
        return (y - m) / jnp.sqrt(v + eps) * w + b

    qkv = x @ params["in_w"].T + params["in_b"]
    q, k, v = jnp.split(qkv, 3, axis=-1)
    q = q.reshape(B, S, nhead, hd).transpose(0, 2, 1, 3)
    k = k.reshape(B, S, nhead, hd).transpose(0, 2, 1, 3)
    v = v.reshape(B, S, nhead, hd).transpose(0, 2, 1, 3)
    sc = jnp.einsum("bhqd,bhkd->bhqk", q, k) / jnp.sqrt(hd)
    p = jax.nn.softmax(sc, axis=-1)
    o = jnp.einsum("bhqk,bhkd->bhqd", p, v).transpose(0, 2, 1, 3).reshape(B, S, D)
    attn = o @ params["out_w"].T + params["out_b"]
    x1 = ln(x + attn, params["ln1_w"], params["ln1_b"])
    ff = jnp.maximum(x1 @ params["w1"].T + params["b1"], 0.0) @ params["w2"].T + params["b2"]
    x2 = ln(x1 + ff, params["ln2_w"], params["ln2_b"])
    return jnp.transpose(x2, (1, 0, 2))


def init_params(key, d_model, nhead, dim_feedforward):
    ks = jax.random.split(key, 8)
    s = 0.05
    return {
        "in_w": jax.random.normal(ks[0], (3 * d_model, d_model), jnp.float32) * s,
        "in_b": jax.random.normal(ks[1], (3 * d_model,), jnp.float32) * s,
        "out_w": jax.random.normal(ks[2], (d_model, d_model), jnp.float32) * s,
        "out_b": jax.random.normal(ks[3], (d_model,), jnp.float32) * s,
        "ln1_w": jnp.ones((d_model,), jnp.float32),
        "ln1_b": jnp.zeros((d_model,), jnp.float32),
        "ln2_w": jnp.ones((d_model,), jnp.float32),
        "ln2_b": jnp.zeros((d_model,), jnp.float32),
        "w1": jax.random.normal(ks[4], (dim_feedforward, d_model), jnp.float32) * s,
        "b1": jax.random.normal(ks[5], (dim_feedforward,), jnp.float32) * s,
        "w2": jax.random.normal(ks[6], (d_model, dim_feedforward), jnp.float32) * s,
        "b2": jax.random.normal(ks[7], (d_model,), jnp.float32) * s,
    }


def _check(S, B, d_model, nhead, dff, key, tol):
    k_in, k_par = jax.random.split(key)
    src = jax.random.normal(k_in, (S, B, d_model), jnp.float32)
    params = init_params(k_par, d_model, nhead, dff)
    out = jax.block_until_ready(transformer_encoder_layer(src, params, nhead=nhead))
    ref = reference(src, params, nhead=nhead)
    assert out.shape == (S, B, d_model)
    assert jnp.allclose(out, ref, atol=tol, rtol=tol), \
        f"mismatch vs JAX reference (S={S}, D={d_model})"
    return out


if __name__ == "__main__":
    # TODO(synk): dropout (p=0.1) is treated as identity (inference/eval semantics).
    key = jax.random.PRNGKey(0)
    k1, k2 = jax.random.split(key)

    # Small, module-consistent shapes: d_model=32, nhead=4, dim_feedforward=64,
    # seq=8, batch=2; input layout (S, B, D) matching batch_first=False.
    _check(S=8, B=2, d_model=32, nhead=4, dff=64, key=k1, tol=3e-2)

    # Larger shape exercising the q-tiled grid + K/V scratch-cache path
    # (S=384 -> TQ=128, 3 q-tiles per batch element).
    _check(S=384, B=2, d_model=128, nhead=4, dff=256, key=k2, tol=3e-2)

    print("KERNEL_OK")
</pallas_src>

<mosaic_0001>
module attributes {stable_mosaic.version = 11 : i64} {
  func.func @encoder_layer_kernel(%arg0: i32, %arg1: i32, %arg2: memref<1x8x32xf32, #tpu.memory_space<vmem>>, %arg3: memref<32x32xbf16, #tpu.memory_space<vmem>>, %arg4: memref<1x32xf32, #tpu.memory_space<vmem>>, %arg5: memref<32x64xbf16, #tpu.memory_space<vmem>>, %arg6: memref<1x64xf32, #tpu.memory_space<vmem>>, %arg7: memref<32x32xbf16, #tpu.memory_space<vmem>>, %arg8: memref<1x32xf32, #tpu.memory_space<vmem>>, %arg9: memref<1x32xf32, #tpu.memory_space<vmem>>, %arg10: memref<1x32xf32, #tpu.memory_space<vmem>>, %arg11: memref<1x32xf32, #tpu.memory_space<vmem>>, %arg12: memref<1x32xf32, #tpu.memory_space<vmem>>, %arg13: memref<32x64xbf16, #tpu.memory_space<vmem>>, %arg14: memref<1x64xf32, #tpu.memory_space<vmem>>, %arg15: memref<64x32xbf16, #tpu.memory_space<vmem>>, %arg16: memref<1x32xf32, #tpu.memory_space<vmem>>, %arg17: memref<1x8x32xf32, #tpu.memory_space<vmem>>, %arg18: memref<8x32xbf16, #tpu.memory_space<vmem>>, %arg19: memref<8x32xbf16, #tpu.memory_space<vmem>>, %arg20: memref<8x32xbf16, #tpu.memory_space<vmem>>) attributes {dimension_semantics = [#tpu.dimension_semantics<parallel>, #tpu.dimension_semantics<arbitrary>], iteration_bounds = array<i64: 2, 1>, scalar_prefetch = 0 : i64, scratch_operands = 3 : i64, tpu.core_type = #tpu.core_type<tc>, window_params = [{transform_indices = @transform_0, window_bounds = array<i64: 1, 8, 32>}, {pipeline_mode = #tpu.pipeline_mode<synchronous>, transform_indices = @transform_1, window_bounds = array<i64: 32, 32>}, {pipeline_mode = #tpu.pipeline_mode<synchronous>, transform_indices = @transform_2, window_bounds = array<i64: 1, 32>}, {pipeline_mode = #tpu.pipeline_mode<synchronous>, transform_indices = @transform_3, window_bounds = array<i64: 32, 64>}, {pipeline_mode = #tpu.pipeline_mode<synchronous>, transform_indices = @transform_4, window_bounds = array<i64: 1, 64>}, {pipeline_mode = #tpu.pipeline_mode<synchronous>, transform_indices = @transform_5, window_bounds = array<i64: 32, 32>}, {pipeline_mode = #tpu.pipeline_mode<synchronous>, transform_indices = @transform_6, window_bounds = array<i64: 1, 32>}, {pipeline_mode = #tpu.pipeline_mode<synchronous>, transform_indices = @transform_7, window_bounds = array<i64: 1, 32>}, {pipeline_mode = #tpu.pipeline_mode<synchronous>, transform_indices = @transform_8, window_bounds = array<i64: 1, 32>}, {pipeline_mode = #tpu.pipeline_mode<synchronous>, transform_indices = @transform_9, window_bounds = array<i64: 1, 32>}, {pipeline_mode = #tpu.pipeline_mode<synchronous>, transform_indices = @transform_10, window_bounds = array<i64: 1, 32>}, {pipeline_mode = #tpu.pipeline_mode<synchronous>, transform_indices = @transform_11, window_bounds = array<i64: 32, 64>}, {pipeline_mode = #tpu.pipeline_mode<synchronous>, transform_indices = @transform_12, window_bounds = array<i64: 1, 64>}, {pipeline_mode = #tpu.pipeline_mode<synchronous>, transform_indices = @transform_13, window_bounds = array<i64: 64, 32>}, {pipeline_mode = #tpu.pipeline_mode<synchronous>, transform_indices = @transform_14, window_bounds = array<i64: 1, 32>}, {transform_indices = @transform_15, window_bounds = array<i64: 1, 8, 32>}]} {
    %c0_i32 = arith.constant 0 : i32
    %0 = arith.cmpi eq, %arg1, %c0_i32 : i32
    %1 = arith.extui %0 : i1 to i32
    %c0_i32_0 = arith.constant 0 : i32
    %2 = arith.cmpi ne, %1, %c0_i32_0 : i32
    scf.if %2 {
      %c0_71 = arith.constant 0 : index
      %c0_72 = arith.constant 0 : index
      %c0_73 = arith.constant 0 : index
      %160 = vector.load %arg2[%c0_71, %c0_72, %c0_73] : memref<1x8x32xf32, #tpu.memory_space<vmem>>, vector<1x8x32xf32>
      %161 = vector.shape_cast %160 : vector<1x8x32xf32> to vector<8x32xf32>
      %162 = arith.truncf %161 : vector<8x32xf32> to vector<8x32xbf16>
      %c0_74 = arith.constant 0 : index
      %c0_75 = arith.constant 0 : index
      %163 = vector.load %arg5[%c0_74, %c0_75] : memref<32x64xbf16, #tpu.memory_space<vmem>>, vector<32x64xbf16>
      %cst_76 = arith.constant dense<0.000000e+00> : vector<8x64xf32>
      %164 = tpu.matmul %162, %163, %cst_76 {dimension_numbers = #tpu.dot_dimension_numbers<[1], [0], [0], [1], [0, 0, 1, 1], [], []>} : vector<8x32xbf16>, vector<32x64xbf16>, vector<8x64xf32> -> vector<8x64xf32>
      %c0_77 = arith.constant 0 : index
      %c0_78 = arith.constant 0 : index
      %165 = vector.load %arg6[%c0_77, %c0_78] : memref<1x64xf32, #tpu.memory_space<vmem>>, vector<1x64xf32>
      %166 = vector.broadcast %165 : vector<1x64xf32> to vector<8x64xf32>
      %167 = arith.addf %164, %166 : vector<8x64xf32>
      %168 = vector.extract_strided_slice %167 {offsets = [0, 0], sizes = [8, 32], strides = [1, 1]} : vector<8x64xf32> to vector<8x32xf32>
      %169 = arith.truncf %168 : vector<8x32xf32> to vector<8x32xbf16>
      %c0_79 = arith.constant 0 : index
      %c0_80 = arith.constant 0 : index
      %170 = vector.load %arg18[%c0_79, %c0_80] : memref<8x32xbf16, #tpu.memory_space<vmem>>, vector<8x32xbf16>
      tpu.vector_store %arg18[%c0_79, %c0_80], %169 {strides = array<i32>} : memref<8x32xbf16, #tpu.memory_space<vmem>>, vector<8x32xbf16>,
      %171 = vector.extract_strided_slice %167 {offsets = [0, 32], sizes = [8, 32], strides = [1, 1]} : vector<8x64xf32> to vector<8x32xf32>
      %172 = arith.truncf %171 : vector<8x32xf32> to vector<8x32xbf16>
      %c0_81 = arith.constant 0 : index
      %c0_82 = arith.constant 0 : index
      %173 = vector.load %arg19[%c0_81, %c0_82] : memref<8x32xbf16, #tpu.memory_space<vmem>>, vector<8x32xbf16>
      tpu.vector_store %arg19[%c0_81, %c0_82], %172 {strides = array<i32>} : memref<8x32xbf16, #tpu.memory_space<vmem>>, vector<8x32xbf16>,
    } else {
    }
    %c8_i32 = arith.constant 8 : i32
    %3 = arith.muli %arg1, %c8_i32 : i32
    %4 = tpu.assume_multiple %3, 8 : i32
    %c0 = arith.constant 0 : index
    %5 = arith.index_cast %4 : i32 to index
    %c0_1 = arith.constant 0 : index
    %6 = vector.load %arg2[%c0, %5, %c0_1] : memref<1x8x32xf32, #tpu.memory_space<vmem>>, vector<1x8x32xf32>
    %7 = vector.shape_cast %6 : vector<1x8x32xf32> to vector<8x32xf32>
    %8 = arith.truncf %7 : vector<8x32xf32> to vector<8x32xbf16>
    %c0_2 = arith.constant 0 : index
    %c0_3 = arith.constant 0 : index
    %9 = vector.load %arg3[%c0_2, %c0_3] : memref<32x32xbf16, #tpu.memory_space<vmem>>, vector<32x32xbf16>
    %cst = arith.constant dense<0.000000e+00> : vector<8x32xf32>
    %10 = tpu.matmul %8, %9, %cst {dimension_numbers = #tpu.dot_dimension_numbers<[1], [0], [0], [1], [0, 0, 1, 1], [], []>} : vector<8x32xbf16>, vector<32x32xbf16>, vector<8x32xf32> -> vector<8x32xf32>
    %c0_4 = arith.constant 0 : index
    %c0_5 = arith.constant 0 : index
    %11 = vector.load %arg4[%c0_4, %c0_5] : memref<1x32xf32, #tpu.memory_space<vmem>>, vector<1x32xf32>
    %12 = vector.broadcast %11 : vector<1x32xf32> to vector<8x32xf32>
    %13 = arith.addf %10, %12 : vector<8x32xf32>
    %cst_6 = arith.constant 0.353553385 : f32
    %14 = vector.broadcast %cst_6 : f32 to vector<8x32xf32>
    %15 = arith.mulf %13, %14 : vector<8x32xf32>
    %16 = arith.truncf %15 : vector<8x32xf32> to vector<8x32xbf16>
    %c0_7 = arith.constant 0 : index
    %c0_8 = arith.constant 0 : index
    %17 = vector.load %arg18[%c0_7, %c0_8] : memref<8x32xbf16, #tpu.memory_space<vmem>>, vector<8x32xbf16>
    %c0_9 = arith.constant 0 : index
    %c0_10 = arith.constant 0 : index
    %18 = vector.load %arg19[%c0_9, %c0_10] : memref<8x32xbf16, #tpu.memory_space<vmem>>, vector<8x32xbf16>
    %19 = vector.extract_strided_slice %16 {offsets = [0, 0], sizes = [8, 8], strides = [1, 1]} : vector<8x32xbf16> to vector<8x8xbf16>
    %20 = vector.extract_strided_slice %17 {offsets = [0, 0], sizes = [8, 8], strides = [1, 1]} : vector<8x32xbf16> to vector<8x8xbf16>
    %21 = vector.extract_strided_slice %18 {offsets = [0, 0], sizes = [8, 8], strides = [1, 1]} : vector<8x32xbf16> to vector<8x8xbf16>
    %cst_11 = arith.constant dense<0.000000e+00> : vector<8x8xf32>
    %22 = tpu.matmul %19, %20, %cst_11 {dimension_numbers = #tpu.dot_dimension_numbers<[1], [1], [0], [0], [0, 0, 1, 0], [], []>} : vector<8x8xbf16>, vector<8x8xbf16>, vector<8x8xf32> -> vector<8x8xf32>
    %cst_12 = arith.constant dense<0xFF800000> : vector<8xf32>
    %23 = vector.multi_reduction <maximumf>, %22, %cst_12 [1] : vector<8x8xf32> to vector<8xf32>
    %24 = vector.shape_cast %23 : vector<8xf32> to vector<8x1xf32>
    %25 = vector.broadcast %24 : vector<8x1xf32> to vector<8x8xf32>
    %26 = arith.subf %22, %25 : vector<8x8xf32>
    %27 = math.exp %26 : vector<8x8xf32>
    %cst_13 = arith.constant dense<0.000000e+00> : vector<8xf32>
    %28 = vector.multi_reduction <add>, %27, %cst_13 [1] : vector<8x8xf32> to vector<8xf32>
    %29 = vector.shape_cast %28 : vector<8xf32> to vector<8x1xf32>
    %30 = tpu.reciprocal %29 {approx = true} : vector<8x1xf32> -> vector<8x1xf32>
    %31 = vector.broadcast %30 : vector<8x1xf32> to vector<8x8xf32>
    %32 = arith.mulf %27, %31 : vector<8x8xf32>
    %33 = arith.truncf %32 : vector<8x8xf32> to vector<8x8xbf16>
    %cst_14 = arith.constant dense<0.000000e+00> : vector<8x8xf32>
    %34 = tpu.matmul %33, %21, %cst_14 {dimension_numbers = #tpu.dot_dimension_numbers<[1], [0], [0], [1], [0, 0, 1, 1], [], []>} : vector<8x8xbf16>, vector<8x8xbf16>, vector<8x8xf32> -> vector<8x8xf32>
    %35 = arith.truncf %34 : vector<8x8xf32> to vector<8x8xbf16>
    %c0_15 = arith.constant 0 : index
    %c0_16 = arith.constant 0 : index
    %36 = vector.load %arg20[%c0_15, %c0_16] : memref<8x32xbf16, #tpu.memory_space<vmem>>, vector<8x8xbf16>
    tpu.vector_store %arg20[%c0_15, %c0_16], %35 {strides = array<i32>} : memref<8x32xbf16, #tpu.memory_space<vmem>>, vector<8x8xbf16>,
    %37 = vector.extract_strided_slice %16 {offsets = [0, 8], sizes = [8, 8], strides = [1, 1]} : vector<8x32xbf16> to vector<8x8xbf16>
    %38 = vector.extract_strided_slice %17 {offsets = [0, 8], sizes = [8, 8], strides = [1, 1]} : vector<8x32xbf16> to vector<8x8xbf16>
    %39 = vector.extract_strided_slice %18 {offsets = [0, 8], sizes = [8, 8], strides = [1, 1]} : vector<8x32xbf16> to vector<8x8xbf16>
    %cst_17 = arith.constant dense<0.000000e+00> : vector<8x8xf32>
    %40 = tpu.matmul %37, %38, %cst_17 {dimension_numbers = #tpu.dot_dimension_numbers<[1], [1], [0], [0], [0, 0, 1, 0], [], []>} : vector<8x8xbf16>, vector<8x8xbf16>, vector<8x8xf32> -> vector<8x8xf32>
    %cst_18 = arith.constant dense<0xFF800000> : vector<8xf32>
    %41 = vector.multi_reduction <maximumf>, %40, %cst_18 [1] : vector<8x8xf32> to vector<8xf32>
    %42 = vector.shape_cast %41 : vector<8xf32> to vector<8x1xf32>
    %43 = vector.broadcast %42 : vector<8x1xf32> to vector<8x8xf32>
    %44 = arith.subf %40, %43 : vector<8x8xf32>
    %45 = math.exp %44 : vector<8x8xf32>
    %cst_19 = arith.constant dense<0.000000e+00> : vector<8xf32>
    %46 = vector.multi_reduction <add>, %45, %cst_19 [1] : vector<8x8xf32> to vector<8xf32>
    %47 = vector.shape_cast %46 : vector<8xf32> to vector<8x1xf32>
    %48 = tpu.reciprocal %47 {approx = true} : vector<8x1xf32> -> vector<8x1xf32>
    %49 = vector.broadcast %48 : vector<8x1xf32> to vector<8x8xf32>
    %50 = arith.mulf %45, %49 : vector<8x8xf32>
    %51 = arith.truncf %50 : vector<8x8xf32> to vector<8x8xbf16>
    %cst_20 = arith.constant dense<0.000000e+00> : vector<8x8xf32>
    %52 = tpu.matmul %51, %39, %cst_20 {dimension_numbers = #tpu.dot_dimension_numbers<[1], [0], [0], [1], [0, 0, 1, 1], [], []>} : vector<8x8xbf16>, vector<8x8xbf16>, vector<8x8xf32> -> vector<8x8xf32>
    %53 = arith.truncf %52 : vector<8x8xf32> to vector<8x8xbf16>
    %c0_21 = arith.constant 0 : index
    %c8 = arith.constant 8 : index
    %54 = vector.load %arg20[%c0_21, %c8] : memref<8x32xbf16, #tpu.memory_space<vmem>>, vector<8x8xbf16>
    tpu.vector_store %arg20[%c0_21, %c8], %53 {strides = array<i32>} : memref<8x32xbf16, #tpu.memory_space<vmem>>, vector<8x8xbf16>,
    %55 = vector.extract_strided_slice %16 {offsets = [0, 16], sizes = [8, 8], strides = [1, 1]} : vector<8x32xbf16> to vector<8x8xbf16>
    %56 = vector.extract_strided_slice %17 {offsets = [0, 16], sizes = [8, 8], strides = [1, 1]} : vector<8x32xbf16> to vector<8x8xbf16>
    %57 = vector.extract_strided_slice %18 {offsets = [0, 16], sizes = [8, 8], strides = [1, 1]} : vector<8x32xbf16> to vector<8x8xbf16>
    %cst_22 = arith.constant dense<0.000000e+00> : vector<8x8xf32>
    %58 = tpu.matmul %55, %56, %cst_22 {dimension_numbers = #tpu.dot_dimension_numbers<[1], [1], [0], [0], [0, 0, 1, 0], [], []>} : vector<8x8xbf16>, vector<8x8xbf16>, vector<8x8xf32> -> vector<8x8xf32>
    %cst_23 = arith.constant dense<0xFF800000> : vector<8xf32>
    %59 = vector.multi_reduction <maximumf>, %58, %cst_23 [1] : vector<8x8xf32> to vector<8xf32>
    %60 = vector.shape_cast %59 : vector<8xf32> to vector<8x1xf32>
    %61 = vector.broadcast %60 : vector<8x1xf32> to vector<8x8xf32>
    %62 = arith.subf %58, %61 : vector<8x8xf32>
    %63 = math.exp %62 : vector<8x8xf32>
    %cst_24 = arith.constant dense<0.000000e+00> : vector<8xf32>
    %64 = vector.multi_reduction <add>, %63, %cst_24 [1] : vector<8x8xf32> to vector<8xf32>
    %65 = vector.shape_cast %64 : vector<8xf32> to vector<8x1xf32>
    %66 = tpu.reciprocal %65 {approx = true} : vector<8x1xf32> -> vector<8x1xf32>
    %67 = vector.broadcast %66 : vector<8x1xf32> to vector<8x8xf32>
    %68 = arith.mulf %63, %67 : vector<8x8xf32>
    %69 = arith.truncf %68 : vector<8x8xf32> to vector<8x8xbf16>
    %cst_25 = arith.constant dense<0.000000e+00> : vector<8x8xf32>
    %70 = tpu.matmul %69, %57, %cst_25 {dimension_numbers = #tpu.dot_dimension_numbers<[1], [0], [0], [1], [0, 0, 1, 1], [], []>} : vector<8x8xbf16>, vector<8x8xbf16>, vector<8x8xf32> -> vector<8x8xf32>
    %71 = arith.truncf %70 : vector<8x8xf32> to vector<8x8xbf16>
    %c0_26 = arith.constant 0 : index
    %c16 = arith.constant 16 : index
    %72 = vector.load %arg20[%c0_26, %c16] : memref<8x32xbf16, #tpu.memory_space<vmem>>, vector<8x8xbf16>
    tpu.vector_store %arg20[%c0_26, %c16], %71 {strides = array<i32>} : memref<8x32xbf16, #tpu.memory_space<vmem>>, vector<8x8xbf16>,
    %73 = vector.extract_strided_slice %16 {offsets = [0, 24], sizes = [8, 8], strides = [1, 1]} : vector<8x32xbf16> to vector<8x8xbf16>
    %74 = vector.extract_strided_slice %17 {offsets = [0, 24], sizes = [8, 8], strides = [1, 1]} : vector<8x32xbf16> to vector<8x8xbf16>
    %75 = vector.extract_strided_slice %18 {offsets = [0, 24], sizes = [8, 8], strides = [1, 1]} : vector<8x32xbf16> to vector<8x8xbf16>
    %cst_27 = arith.constant dense<0.000000e+00> : vector<8x8xf32>
    %76 = tpu.matmul %73, %74, %cst_27 {dimension_numbers = #tpu.dot_dimension_numbers<[1], [1], [0], [0], [0, 0, 1, 0], [], []>} : vector<8x8xbf16>, vector<8x8xbf16>, vector<8x8xf32> -> vector<8x8xf32>
    %cst_28 = arith.constant dense<0xFF800000> : vector<8xf32>
    %77 = vector.multi_reduction <maximumf>, %76, %cst_28 [1] : vector<8x8xf32> to vector<8xf32>
    %78 = vector.shape_cast %77 : vector<8xf32> to vector<8x1xf32>
    %79 = vector.broadcast %78 : vector<8x1xf32> to vector<8x8xf32>
    %80 = arith.subf %76, %79 : vector<8x8xf32>
    %81 = math.exp %80 : vector<8x8xf32>
    %cst_29 = arith.constant dense<0.000000e+00> : vector<8xf32>
    %82 = vector.multi_reduction <add>, %81, %cst_29 [1] : vector<8x8xf32> to vector<8xf32>
    %83 = vector.shape_cast %82 : vector<8xf32> to vector<8x1xf32>
    %84 = tpu.reciprocal %83 {approx = true} : vector<8x1xf32> -> vector<8x1xf32>
    %85 = vector.broadcast %84 : vector<8x1xf32> to vector<8x8xf32>
    %86 = arith.mulf %81, %85 : vector<8x8xf32>
    %87 = arith.truncf %86 : vector<8x8xf32> to vector<8x8xbf16>
    %cst_30 = arith.constant dense<0.000000e+00> : vector<8x8xf32>
    %88 = tpu.matmul %87, %75, %cst_30 {dimension_numbers = #tpu.dot_dimension_numbers<[1], [0], [0], [1], [0, 0, 1, 1], [], []>} : vector<8x8xbf16>, vector<8x8xbf16>, vector<8x8xf32> -> vector<8x8xf32>
    %89 = arith.truncf %88 : vector<8x8xf32> to vector<8x8xbf16>
    %c0_31 = arith.constant 0 : index
    %c24 = arith.constant 24 : index
    %90 = vector.load %arg20[%c0_31, %c24] : memref<8x32xbf16, #tpu.memory_space<vmem>>, vector<8x8xbf16>
    tpu.vector_store %arg20[%c0_31, %c24], %89 {strides = array<i32>} : memref<8x32xbf16, #tpu.memory_space<vmem>>, vector<8x8xbf16>,
    %c0_32 = arith.constant 0 : index
    %c0_33 = arith.constant 0 : index
    %91 = vector.load %arg20[%c0_32, %c0_33] : memref<8x32xbf16, #tpu.memory_space<vmem>>, vector<8x32xbf16>
    %c0_34 = arith.constant 0 : index
    %c0_35 = arith.constant 0 : index
    %92 = vector.load %arg7[%c0_34, %c0_35] : memref<32x32xbf16, #tpu.memory_space<vmem>>, vector<32x32xbf16>
    %cst_36 = arith.constant dense<0.000000e+00> : vector<8x32xf32>
    %93 = tpu.matmul %91, %92, %cst_36 {dimension_numbers = #tpu.dot_dimension_numbers<[1], [0], [0], [1], [0, 0, 1, 1], [], []>} : vector<8x32xbf16>, vector<32x32xbf16>, vector<8x32xf32> -> vector<8x32xf32>
    %c0_37 = arith.constant 0 : index
    %c0_38 = arith.constant 0 : index
    %94 = vector.load %arg8[%c0_37, %c0_38] : memref<1x32xf32, #tpu.memory_space<vmem>>, vector<1x32xf32>
    %95 = vector.broadcast %94 : vector<1x32xf32> to vector<8x32xf32>
    %96 = arith.addf %93, %95 : vector<8x32xf32>
    %97 = arith.addf %7, %96 : vector<8x32xf32>
    %c0_39 = arith.constant 0 : index
    %c0_40 = arith.constant 0 : index
    %98 = vector.load %arg9[%c0_39, %c0_40] : memref<1x32xf32, #tpu.memory_space<vmem>>, vector<1x32xf32>
    %c0_41 = arith.constant 0 : index
    %c0_42 = arith.constant 0 : index
    %99 = vector.load %arg10[%c0_41, %c0_42] : memref<1x32xf32, #tpu.memory_space<vmem>>, vector<1x32xf32>
    %cst_43 = arith.constant dense<0.000000e+00> : vector<8xf32>
    %100 = vector.multi_reduction <add>, %97, %cst_43 [1] : vector<8x32xf32> to vector<8xf32>
    %101 = vector.shape_cast %100 : vector<8xf32> to vector<8x1xf32>
    %cst_44 = arith.constant 3.200000e+01 : f32
    %102 = vector.broadcast %cst_44 : f32 to vector<8x1xf32>
    %103 = arith.divf %101, %102 : vector<8x1xf32>
    %104 = vector.broadcast %103 : vector<8x1xf32> to vector<8x32xf32>
    %105 = arith.subf %97, %104 : vector<8x32xf32>
    %106 = arith.mulf %105, %105 : vector<8x32xf32>
    %cst_45 = arith.constant dense<0.000000e+00> : vector<8xf32>
    %107 = vector.multi_reduction <add>, %106, %cst_45 [1] : vector<8x32xf32> to vector<8xf32>
    %108 = vector.shape_cast %107 : vector<8xf32> to vector<8x1xf32>
    %cst_46 = arith.constant 3.200000e+01 : f32
    %109 = vector.broadcast %cst_46 : f32 to vector<8x1xf32>
    %110 = arith.divf %108, %109 : vector<8x1xf32>
    %cst_47 = arith.constant 9.99999974E-6 : f32
    %111 = vector.broadcast %cst_47 : f32 to vector<8x1xf32>
    %112 = arith.addf %110, %111 : vector<8x1xf32>
    %113 = math.rsqrt %112 : vector<8x1xf32>
    %114 = vector.broadcast %113 : vector<8x1xf32> to vector<8x32xf32>
    %115 = arith.mulf %105, %114 : vector<8x32xf32>
    %116 = vector.broadcast %98 : vector<1x32xf32> to vector<8x32xf32>
    %117 = arith.mulf %115, %116 : vector<8x32xf32>
    %118 = vector.broadcast %99 : vector<1x32xf32> to vector<8x32xf32>
    %119 = arith.addf %117, %118 : vector<8x32xf32>
    %120 = arith.truncf %119 : vector<8x32xf32> to vector<8x32xbf16>
    %c0_48 = arith.constant 0 : index
    %c0_49 = arith.constant 0 : index
    %121 = vector.load %arg13[%c0_48, %c0_49] : memref<32x64xbf16, #tpu.memory_space<vmem>>, vector<32x64xbf16>
    %cst_50 = arith.constant dense<0.000000e+00> : vector<8x64xf32>
    %122 = tpu.matmul %120, %121, %cst_50 {dimension_numbers = #tpu.dot_dimension_numbers<[1], [0], [0], [1], [0, 0, 1, 1], [], []>} : vector<8x32xbf16>, vector<32x64xbf16>, vector<8x64xf32> -> vector<8x64xf32>
    %c0_51 = arith.constant 0 : index
    %c0_52 = arith.constant 0 : index
    %123 = vector.load %arg14[%c0_51, %c0_52] : memref<1x64xf32, #tpu.memory_space<vmem>>, vector<1x64xf32>
    %124 = vector.broadcast %123 : vector<1x64xf32> to vector<8x64xf32>
    %125 = arith.addf %122, %124 : vector<8x64xf32>
    %cst_53 = arith.constant 0.000000e+00 : f32
    %126 = vector.broadcast %cst_53 : f32 to vector<8x64xf32>
    %127 = arith.maximumf %125, %126 : vector<8x64xf32>
    %128 = arith.truncf %127 : vector<8x64xf32> to vector<8x64xbf16>
    %c0_54 = arith.constant 0 : index
    %c0_55 = arith.constant 0 : index
    %129 = vector.load %arg15[%c0_54, %c0_55] : memref<64x32xbf16, #tpu.memory_space<vmem>>, vector<64x32xbf16>
    %cst_56 = arith.constant dense<0.000000e+00> : vector<8x32xf32>
    %130 = tpu.matmul %128, %129, %cst_56 {dimension_numbers = #tpu.dot_dimension_numbers<[1], [0], [0], [1], [0, 0, 1, 1], [], []>} : vector<8x64xbf16>, vector<64x32xbf16>, vector<8x32xf32> -> vector<8x32xf32>
    %c0_57 = arith.constant 0 : index
    %c0_58 = arith.constant 0 : index
    %131 = vector.load %arg16[%c0_57, %c0_58] : memref<1x32xf32, #tpu.memory_space<vmem>>, vector<1x32xf32>
    %132 = vector.broadcast %131 : vector<1x32xf32> to vector<8x32xf32>
    %133 = arith.addf %130, %132 : vector<8x32xf32>
    %134 = arith.addf %119, %133 : vector<8x32xf32>
    %c0_59 = arith.constant 0 : index
    %c0_60 = arith.constant 0 : index
    %135 = vector.load %arg11[%c0_59, %c0_60] : memref<1x32xf32, #tpu.memory_space<vmem>>, vector<1x32xf32>
    %c0_61 = arith.constant 0 : index
    %c0_62 = arith.constant 0 : index
    %136 = vector.load %arg12[%c0_61, %c0_62] : memref<1x32xf32, #tpu.memory_space<vmem>>, vector<1x32xf32>
    %cst_63 = arith.constant dense<0.000000e+00> : vector<8xf32>
    %137 = vector.multi_reduction <add>, %134, %cst_63 [1] : vector<8x32xf32> to vector<8xf32>
    %138 = vector.shape_cast %137 : vector<8xf32> to vector<8x1xf32>
    %cst_64 = arith.constant 3.200000e+01 : f32
    %139 = vector.broadcast %cst_64 : f32 to vector<8x1xf32>
    %140 = arith.divf %138, %139 : vector<8x1xf32>
    %141 = vector.broadcast %140 : vector<8x1xf32> to vector<8x32xf32>
    %142 = arith.subf %134, %141 : vector<8x32xf32>
    %143 = arith.mulf %142, %142 : vector<8x32xf32>
    %cst_65 = arith.constant dense<0.000000e+00> : vector<8xf32>
    %144 = vector.multi_reduction <add>, %143, %cst_65 [1] : vector<8x32xf32> to vector<8xf32>
    %145 = vector.shape_cast %144 : vector<8xf32> to vector<8x1xf32>
    %cst_66 = arith.constant 3.200000e+01 : f32
    %146 = vector.broadcast %cst_66 : f32 to vector<8x1xf32>
    %147 = arith.divf %145, %146 : vector<8x1xf32>
    %cst_67 = arith.constant 9.99999974E-6 : f32
    %148 = vector.broadcast %cst_67 : f32 to vector<8x1xf32>
    %149 = arith.addf %147, %148 : vector<8x1xf32>
    %150 = math.rsqrt %149 : vector<8x1xf32>
    %151 = vector.broadcast %150 : vector<8x1xf32> to vector<8x32xf32>
    %152 = arith.mulf %142, %151 : vector<8x32xf32>
    %153 = vector.broadcast %135 : vector<1x32xf32> to vector<8x32xf32>
    %154 = arith.mulf %152, %153 : vector<8x32xf32>
    %155 = vector.broadcast %136 : vector<1x32xf32> to vector<8x32xf32>
    %156 = arith.addf %154, %155 : vector<8x32xf32>
    %c0_68 = arith.constant 0 : index
    %c0_69 = arith.constant 0 : index
    %c0_70 = arith.constant 0 : index
    %157 = vector.load %arg17[%c0_68, %c0_69, %c0_70] : memref<1x8x32xf32, #tpu.memory_space<vmem>>, vector<1x8x32xf32>
    %158 = vector.shape_cast %157 : vector<1x8x32xf32> to vector<8x32xf32>
    %159 = vector.shape_cast %156 : vector<8x32xf32> to vector<1x8x32xf32>
    tpu.vector_store %arg17[%c0_68, %c0_69, %c0_70], %159 {strides = array<i32>} : memref<1x8x32xf32, #tpu.memory_space<vmem>>, vector<1x8x32xf32>,
    return
  }
  func.func @transform_0(%arg0: i32, %arg1: i32) -> (i32, i32, i32) {
    %c0_i32 = arith.constant 0 : i32
    %c0_i32_0 = arith.constant 0 : i32
    %c0_i32_1 = arith.constant 0 : i32
    return %arg0, %c0_i32, %c0_i32_0 : i32, i32, i32
  }
  func.func @transform_1(%arg0: i32, %arg1: i32) -> (i32, i32) {
    %c0_i32 = arith.constant 0 : i32
    %c0_i32_0 = arith.constant 0 : i32
    %c0_i32_1 = arith.constant 0 : i32
    return %c0_i32, %c0_i32_0 : i32, i32
  }
  func.func @transform_2(%arg0: i32, %arg1: i32) -> (i32, i32) {
    %c0_i32 = arith.constant 0 : i32
    %c0_i32_0 = arith.constant 0 : i32
    %c0_i32_1 = arith.constant 0 : i32
    return %c0_i32, %c0_i32_0 : i32, i32
  }
  func.func @transform_3(%arg0: i32, %arg1: i32) -> (i32, i32) {
    %c0_i32 = arith.constant 0 : i32
    %c0_i32_0 = arith.constant 0 : i32
    %c0_i32_1 = arith.constant 0 : i32
    return %c0_i32, %c0_i32_0 : i32, i32
  }
  func.func @transform_4(%arg0: i32, %arg1: i32) -> (i32, i32) {
    %c0_i32 = arith.constant 0 : i32
    %c0_i32_0 = arith.constant 0 : i32
    %c0_i32_1 = arith.constant 0 : i32
    return %c0_i32, %c0_i32_0 : i32, i32
  }
  func.func @transform_5(%arg0: i32, %arg1: i32) -> (i32, i32) {
    %c0_i32 = arith.constant 0 : i32
    %c0_i32_0 = arith.constant 0 : i32
    %c0_i32_1 = arith.constant 0 : i32
    return %c0_i32, %c0_i32_0 : i32, i32
  }
  func.func @transform_6(%arg0: i32, %arg1: i32) -> (i32, i32) {
    %c0_i32 = arith.constant 0 : i32
    %c0_i32_0 = arith.constant 0 : i32
    %c0_i32_1 = arith.constant 0 : i32
    return %c0_i32, %c0_i32_0 : i32, i32
  }
  func.func @transform_7(%arg0: i32, %arg1: i32) -> (i32, i32) {
    %c0_i32 = arith.constant 0 : i32
    %c0_i32_0 = arith.constant 0 : i32
    %c0_i32_1 = arith.constant 0 : i32
    return %c0_i32, %c0_i32_0 : i32, i32
  }
  func.func @transform_8(%arg0: i32, %arg1: i32) -> (i32, i32) {
    %c0_i32 = arith.constant 0 : i32
    %c0_i32_0 = arith.constant 0 : i32
    %c0_i32_1 = arith.constant 0 : i32
    return %c0_i32, %c0_i32_0 : i32, i32
  }
  func.func @transform_9(%arg0: i32, %arg1: i32) -> (i32, i32) {
    %c0_i32 = arith.constant 0 : i32
    %c0_i32_0 = arith.constant 0 : i32
    %c0_i32_1 = arith.constant 0 : i32
    return %c0_i32, %c0_i32_0 : i32, i32
  }
  func.func @transform_10(%arg0: i32, %arg1: i32) -> (i32, i32) {
    %c0_i32 = arith.constant 0 : i32
    %c0_i32_0 = arith.constant 0 : i32
    %c0_i32_1 = arith.constant 0 : i32
    return %c0_i32, %c0_i32_0 : i32, i32
  }
  func.func @transform_11(%arg0: i32, %arg1: i32) -> (i32, i32) {
    %c0_i32 = arith.constant 0 : i32
    %c0_i32_0 = arith.constant 0 : i32
    %c0_i32_1 = arith.constant 0 : i32
    return %c0_i32, %c0_i32_0 : i32, i32
  }
  func.func @transform_12(%arg0: i32, %arg1: i32) -> (i32, i32) {
    %c0_i32 = arith.constant 0 : i32
    %c0_i32_0 = arith.constant 0 : i32
    %c0_i32_1 = arith.constant 0 : i32
    return %c0_i32, %c0_i32_0 : i32, i32
  }
  func.func @transform_13(%arg0: i32, %arg1: i32) -> (i32, i32) {
    %c0_i32 = arith.constant 0 : i32
    %c0_i32_0 = arith.constant 0 : i32
    %c0_i32_1 = arith.constant 0 : i32
    return %c0_i32, %c0_i32_0 : i32, i32
  }
  func.func @transform_14(%arg0: i32, %arg1: i32) -> (i32, i32) {
    %c0_i32 = arith.constant 0 : i32
    %c0_i32_0 = arith.constant 0 : i32
    %c0_i32_1 = arith.constant 0 : i32
    return %c0_i32, %c0_i32_0 : i32, i32
  }
  func.func @transform_15(%arg0: i32, %arg1: i32) -> (i32, i32, i32) {
    %c0_i32 = arith.constant 0 : i32
    %c0_i32_0 = arith.constant 0 : i32
    return %arg0, %arg1, %c0_i32 : i32, i32, i32
  }
}

</mosaic_0001>

<llo_original>
// kernel: tpu_custom_call.1
$region0: #{tpu_custom_call.1}
  #allocation0 [shape = 'u32[]', space=smem, size = 0x4, offset = 0x4, fixed_abs, tag = 'smem constant byte address 0x4 - core index']
  #allocation1 [shape = 'u32[72,128]{1,0:T(1,128)}', space=vmem, size = 0x9000, scoped, tag = 'internal scratch']
  #allocation2 [shape = 'bf16[8,32]{1,0:T(8,128)(2,1)}', space=vmem, size = 0x800, scoped, tag = 'scratch operand']
  #allocation3 [shape = 'bf16[8,32]{1,0:T(8,128)(2,1)}', space=vmem, size = 0x800, scoped, tag = 'scratch operand']
  #allocation4 [shape = 'bf16[8,32]{1,0:T(8,128)(2,1)}', space=vmem, size = 0x800, scoped, tag = 'scratch operand']
  %s0 = inlined_call_operand.vmem [shape: f32[2,8,32], index: 0, kind: input, shape index: {}]
  %s1 = inlined_call_operand.vmem [shape: bf16[32,32], index: 1, kind: input, shape index: {}]
  %s2 = inlined_call_operand.vmem [shape: f32[1,32], index: 2, kind: input, shape index: {}]
  %s3 = inlined_call_operand.vmem [shape: bf16[32,64], index: 3, kind: input, shape index: {}]
  %s4 = inlined_call_operand.vmem [shape: f32[1,64], index: 4, kind: input, shape index: {}]
  %s5 = inlined_call_operand.hbm [shape: bf16[32,32], index: 5, kind: input, shape index: {}]
  %s6 = inlined_call_operand.vmem [shape: f32[1,32], index: 6, kind: input, shape index: {}]
  %s7 = inlined_call_operand.vmem [shape: f32[1,32], index: 7, kind: input, shape index: {}]
  %s8 = inlined_call_operand.vmem [shape: f32[1,32], index: 8, kind: input, shape index: {}]
  %s9 = inlined_call_operand.vmem [shape: f32[1,32], index: 9, kind: input, shape index: {}]
  %s10 = inlined_call_operand.vmem [shape: f32[1,32], index: 10, kind: input, shape index: {}]
  %s11 = inlined_call_operand.hbm [shape: bf16[32,64], index: 11, kind: input, shape index: {}]
  %s12 = inlined_call_operand.vmem [shape: f32[1,64], index: 12, kind: input, shape index: {}]
  %s13 = inlined_call_operand.vmem [shape: bf16[64,32], index: 13, kind: input, shape index: {}]
  %s14 = inlined_call_operand.vmem [shape: f32[1,32], index: 14, kind: input, shape index: {}]
  %s15 = inlined_call_operand.hbm [shape: f32[2,8,32], index: 15, kind: output, shape index: {}]
  %s16 = sld [smem:[#allocation0]]
  $region105: #{tpu_custom_call.1} parent=0
    _
  %s18 = ssub.s32 1, %s16
  %s19 = scalar_select 0, %s18, %s16
  $region1: #{tpu_custom_call.1} parent=0
    #allocation5 [shape = 'u8[8192]{0}', space=vmem, size = 0x2000, scoped, tag = 'input window, operand 5, single buffered']
    #allocation6 [shape = 's32[2]{0}', space=sflag, size = 0x8, scoped, tag = 'scoped memory for tpu_custom_call.1']
    #allocation7 [shape = 's32[2]{0}', space=sflag, size = 0x8, scoped, tag = 'scoped memory for tpu_custom_call.1']
    #allocation8 [shape = 'u8[8192]{0}', space=vmem, size = 0x2000, scoped, tag = 'input window, operand 11, single buffered']
    #allocation9 [shape = 's32[1]{0}', space=sflag, size = 0x4, scoped, tag = 'scoped memory for tpu_custom_call.1']
    #allocation10 [shape = 'u8[8192]{0}', space=vmem, size = 0x2000, scoped, tag = 'output window, operand 0']
    %20 = vsyncpa [#allocation6], 0
    %21 = vsyncpa [#allocation9], 0
    %22 = vsyncpa [#allocation7], 0
    %s23 = scalar_lea.sflag [#allocation7], 1
    %24 = vsyncpa %s23, 0
    loop: start=0, step=1, limit=4
    $region2: #{tpu_custom_call.1} parent=1 // loop_pre_header
      _
    $region3: #{tpu_custom_call.1} parent=1 // loop_header
      %s26 = sphi 0, %s30
      %p27 = scmp.ge.s32.totalorder %s26, 4
      %s33 = sphi 0, %s45
      %s34 = sphi 0, %s41
      %s35 = sphi 0, %s33
      %s36 = sphi 0, %s34
      %s37 = sphi 0, %s35
      %s38 = sphi 0, %s36
      %s48 = sphi 0, %s50
      %s51 = sphi 0, %s48
      %s52 = sphi 0, %s51
      %s68 = sphi 0, %s52
      %s72 = sphi 0, %s72
      %s74 = sphi 0, %s72
      %s75 = sphi 0, %s74
      %s89 = sphi 0, %s75
      %s93 = sphi 0, %s93
      %s95 = sphi 0, %s93
      %s96 = sphi 0, %s95
      %s110 = sphi 0, %s96
      %s114 = sphi 0, %s114
      %s116 = sphi 0, %s114
      %s117 = sphi 0, %s116
      %s131 = sphi 0, %s117
      %s135 = sphi 0, %s135
      %s137 = sphi 0, %s135
      %s138 = sphi 0, %s137
      %s152 = sphi 0, %s138
      %s156 = sphi 0, %s156
      %s158 = sphi 0, %s156
      %s159 = sphi 0, %s158
      %s173 = sphi 0, %s159
      %s177 = sphi 0, %s177
      %s179 = sphi 0, %s177
      %s180 = sphi 0, %s179
      %s194 = sphi 0, %s180
      %s198 = sphi 0, %s198
      %s200 = sphi 0, %s198
      %s201 = sphi 0, %s200
      %s215 = sphi 0, %s201
      %s219 = sphi 0, %s219
      %s221 = sphi 0, %s219
      %s222 = sphi 0, %s221
      %s236 = sphi 0, %s222
      %s240 = sphi 0, %s240
      %s242 = sphi 0, %s240
      %s243 = sphi 0, %s242
      %s257 = sphi 0, %s243
      %s261 = sphi 0, %s261
      %s263 = sphi 0, %s261
      %s264 = sphi 0, %s263
      %s278 = sphi 0, %s264
      %s282 = sphi 0, %s282
      %s284 = sphi 0, %s282
      %s285 = sphi 0, %s284
      %s299 = sphi 0, %s285
      %s303 = sphi 0, %s303
      %s305 = sphi 0, %s303
      %s306 = sphi 0, %s305
      %s320 = sphi 0, %s306
      %s324 = sphi 0, %s324
      %s326 = sphi 0, %s324
      %s327 = sphi 0, %s326
      %s341 = sphi 0, %s327
      %s345 = sphi 0, %s345
      %s347 = sphi 0, %s345
      %s348 = sphi 0, %s347
      %s362 = sphi 0, %s348
      %s370 = sphi 0, %s372
      %s373 = sphi 0, %s370
      %s374 = sphi 0, %s373
      %s390 = sphi 0, %s374
    $region4: #{tpu_custom_call.1} parent=1 // loop_header_branch
      %29 = sbr.rel (%p27) target = $region8
    $region5: #{tpu_custom_call.1} parent=1 // loop_body
      %s31 = ssub.s32 %s26, 1
      %s32 = ssub.s32 %s26, 2
      %s39 = sadd.s32 1, %s34
      %p40 = scmp.ge.s32.totalorder %s39, 1
      %s41 = scalar_select %p40, 0, %s39
      %s42 = sadd.s32 1, %s33
      %s43 = scalar_select %p40, %s42, %s33
      %p44 = scmp.ge.s32.totalorder %s43, 2
      %s45 = scalar_select %p44, 0, %s43
      %s46 = ssub.s32 %s33, %s45
      %p47 = scmp.eq.s32.totalorder %s46, 0
      %s49 = sadd.s32 %s48, 1
      %s50 = scalar_select %p47, %s48, %s49
      %p53 = pneg %p47
      %p54 = scmp.eq.s32.totalorder %s26, 1
      %p55 = por %p53, %p54
      %p56 = scmp.ne.s32.totalorder %s48, %s51
      %p57 = scmp.eq.s32.totalorder %s26, 0
      %p58 = por %p56, %p57
      %p59 = scmp.ne.s32.totalorder %s48, %s51
      %p60 = scmp.eq.s32.totalorder %s31, 1
      %p61 = por %p59, %p60
      %p62 = scmp.ne.s32.totalorder %s51, %s52
      %p63 = scmp.eq.s32.totalorder %s31, 0
      %p64 = por %p62, %p63
      %p65 = scmp.ne.s32.totalorder %s51, %s52
      %p66 = scmp.eq.s32.totalorder %s32, 1
      %p67 = por %p65, %p66
      %p69 = scmp.ne.s32.totalorder %s52, %s68
      %p70 = scmp.eq.s32.totalorder %s32, 0
      %p71 = por %p69, %p70
      %s73 = sadd.s32 %s72, 1
      %p76 = scmp.eq.s32.totalorder %s26, 1
      %p77 = scmp.ne.s32.totalorder %s72, %s74
      %p78 = scmp.eq.s32.totalorder %s26, 0
      %p79 = por %p77, %p78
      %p80 = scmp.ne.s32.totalorder %s72, %s74
      %p81 = scmp.eq.s32.totalorder %s31, 1
      %p82 = por %p80, %p81
      %p83 = scmp.ne.s32.totalorder %s74, %s75
      %p84 = scmp.eq.s32.totalorder %s31, 0
      %p85 = por %p83, %p84
      %p86 = scmp.ne.s32.totalorder %s74, %s75
      %p87 = scmp.eq.s32.totalorder %s32, 1
      %p88 = por %p86, %p87
      %p90 = scmp.ne.s32.totalorder %s75, %s89
      %p91 = scmp.eq.s32.totalorder %s32, 0
      %p92 = por %p90, %p91
      %s94 = sadd.s32 %s93, 1
      %p97 = scmp.eq.s32.totalorder %s26, 1
      %p98 = scmp.ne.s32.totalorder %s93, %s95
      %p99 = scmp.eq.s32.totalorder %s26, 0
      %p100 = por %p98, %p99
      %p101 = scmp.ne.s32.totalorder %s93, %s95
      %p102 = scmp.eq.s32.totalorder %s31, 1
      %p103 = por %p101, %p102
      %p104 = scmp.ne.s32.totalorder %s95, %s96
      %p105 = scmp.eq.s32.totalorder %s31, 0
      %p106 = por %p104, %p105
      %p107 = scmp.ne.s32.totalorder %s95, %s96
      %p108 = scmp.eq.s32.totalorder %s32, 1
      %p109 = por %p107, %p108
      %p111 = scmp.ne.s32.totalorder %s96, %s110
      %p112 = scmp.eq.s32.totalorder %s32, 0
      %p113 = por %p111, %p112
      %s115 = sadd.s32 %s114, 1
      %p118 = scmp.eq.s32.totalorder %s26, 1
      %p119 = scmp.ne.s32.totalorder %s114, %s116
      %p120 = scmp.eq.s32.totalorder %s26, 0
      %p121 = por %p119, %p120
      %p122 = scmp.ne.s32.totalorder %s114, %s116
      %p123 = scmp.eq.s32.totalorder %s31, 1
      %p124 = por %p122, %p123
      %p125 = scmp.ne.s32.totalorder %s116, %s117
      %p126 = scmp.eq.s32.totalorder %s31, 0
      %p127 = por %p125, %p126
      %p128 = scmp.ne.s32.totalorder %s116, %s117
      %p129 = scmp.eq.s32.totalorder %s32, 1
      %p130 = por %p128, %p129
      %p132 = scmp.ne.s32.totalorder %s117, %s131
      %p133 = scmp.eq.s32.totalorder %s32, 0
      %p134 = por %p132, %p133
      %s136 = sadd.s32 %s135, 1
      %p139 = scmp.eq.s32.totalorder %s26, 1
      %p140 = scmp.ne.s32.totalorder %s135, %s137
      %p141 = scmp.eq.s32.totalorder %s26, 0
      %p142 = por %p140, %p141
      %p143 = scmp.ne.s32.totalorder %s135, %s137
      %p144 = scmp.eq.s32.totalorder %s31, 1
      %p145 = por %p143, %p144
      %p146 = scmp.ne.s32.totalorder %s137, %s138
      %p147 = scmp.eq.s32.totalorder %s31, 0
      %p148 = por %p146, %p147
      %p149 = scmp.ne.s32.totalorder %s137, %s138
      %p150 = scmp.eq.s32.totalorder %s32, 1
      %p151 = por %p149, %p150
      %p153 = scmp.ne.s32.totalorder %s138, %s152
      %p154 = scmp.eq.s32.totalorder %s32, 0
      %p155 = por %p153, %p154
      %s157 = sadd.s32 %s156, 1
      %p160 = scmp.eq.s32.totalorder %s26, 1
      %p161 = scmp.ne.s32.totalorder %s156, %s158
      %p162 = scmp.eq.s32.totalorder %s26, 0
      %p163 = por %p161, %p162
      %p164 = scmp.ne.s32.totalorder %s156, %s158
      %p165 = scmp.eq.s32.totalorder %s31, 1
      %p166 = por %p164, %p165
      %p167 = scmp.ne.s32.totalorder %s158, %s159
      %p168 = scmp.eq.s32.totalorder %s31, 0
      %p169 = por %p167, %p168
      %p170 = scmp.ne.s32.totalorder %s158, %s159
      %p171 = scmp.eq.s32.totalorder %s32, 1
      %p172 = por %p170, %p171
      %p174 = scmp.ne.s32.totalorder %s159, %s173
      %p175 = scmp.eq.s32.totalorder %s32, 0
      %p176 = por %p174, %p175
      %s178 = sadd.s32 %s177, 1
      %p181 = scmp.eq.s32.totalorder %s26, 1
      %p182 = scmp.ne.s32.totalorder %s177, %s179
      %p183 = scmp.eq.s32.totalorder %s26, 0
      %p184 = por %p182, %p183
      %p185 = scmp.ne.s32.totalorder %s177, %s179
      %p186 = scmp.eq.s32.totalorder %s31, 1
      %p187 = por %p185, %p186
      %p188 = scmp.ne.s32.totalorder %s179, %s180
      %p189 = scmp.eq.s32.totalorder %s31, 0
      %p190 = por %p188, %p189
      %p191 = scmp.ne.s32.totalorder %s179, %s180
      %p192 = scmp.eq.s32.totalorder %s32, 1
      %p193 = por %p191, %p192
      %p195 = scmp.ne.s32.totalorder %s180, %s194
      %p196 = scmp.eq.s32.totalorder %s32, 0
      %p197 = por %p195, %p196
      %s199 = sadd.s32 %s198, 1
      %p202 = scmp.eq.s32.totalorder %s26, 1
      %p203 = scmp.ne.s32.totalorder %s198, %s200
      %p204 = scmp.eq.s32.totalorder %s26, 0
      %p205 = por %p203, %p204
      %p206 = scmp.ne.s32.totalorder %s198, %s200
      %p207 = scmp.eq.s32.totalorder %s31, 1
      %p208 = por %p206, %p207
      %p209 = scmp.ne.s32.totalorder %s200, %s201
      %p210 = scmp.eq.s32.totalorder %s31, 0
      %p211 = por %p209, %p210
      %p212 = scmp.ne.s32.totalorder %s200, %s201
      %p213 = scmp.eq.s32.totalorder %s32, 1
      %p214 = por %p212, %p213
      %p216 = scmp.ne.s32.totalorder %s201, %s215
      %p217 = scmp.eq.s32.totalorder %s32, 0
      %p218 = por %p216, %p217
      %s220 = sadd.s32 %s219, 1
      %p223 = scmp.eq.s32.totalorder %s26, 1
      %p224 = scmp.ne.s32.totalorder %s219, %s221
      %p225 = scmp.eq.s32.totalorder %s26, 0
      %p226 = por %p224, %p225
      %p227 = scmp.ne.s32.totalorder %s219, %s221
      %p228 = scmp.eq.s32.totalorder %s31, 1
      %p229 = por %p227, %p228
      %p230 = scmp.ne.s32.totalorder %s221, %s222
      %p231 = scmp.eq.s32.totalorder %s31, 0
      %p232 = por %p230, %p231
      %p233 = scmp.ne.s32.totalorder %s221, %s222
      %p234 = scmp.eq.s32.totalorder %s32, 1
      %p235 = por %p233, %p234
      %p237 = scmp.ne.s32.totalorder %s222, %s236
      %p238 = scmp.eq.s32.totalorder %s32, 0
      %p239 = por %p237, %p238
      %s241 = sadd.s32 %s240, 1
      %p244 = scmp.eq.s32.totalorder %s26, 1
      %p245 = scmp.ne.s32.totalorder %s240, %s242
      %p246 = scmp.eq.s32.totalorder %s26, 0
      %p247 = por %p245, %p246
      %p248 = scmp.ne.s32.totalorder %s240, %s242
      %p249 = scmp.eq.s32.totalorder %s31, 1
      %p250 = por %p248, %p249
      %p251 = scmp.ne.s32.totalorder %s242, %s243
      %p252 = scmp.eq.s32.totalorder %s31, 0
      %p253 = por %p251, %p252
      %p254 = scmp.ne.s32.totalorder %s242, %s243
      %p255 = scmp.eq.s32.totalorder %s32, 1
      %p256 = por %p254, %p255
      %p258 = scmp.ne.s32.totalorder %s243, %s257
      %p259 = scmp.eq.s32.totalorder %s32, 0
      %p260 = por %p258, %p259
      %s262 = sadd.s32 %s261, 1
      %p265 = scmp.eq.s32.totalorder %s26, 1
      %p266 = scmp.ne.s32.totalorder %s261, %s263
      %p267 = scmp.eq.s32.totalorder %s26, 0
      %p268 = por %p266, %p267
      %p269 = scmp.ne.s32.totalorder %s261, %s263
      %p270 = scmp.eq.s32.totalorder %s31, 1
      %p271 = por %p269, %p270
      %p272 = scmp.ne.s32.totalorder %s263, %s264
      %p273 = scmp.eq.s32.totalorder %s31, 0
      %p274 = por %p272, %p273
      %p275 = scmp.ne.s32.totalorder %s263, %s264
      %p276 = scmp.eq.s32.totalorder %s32, 1
      %p277 = por %p275, %p276
      %p279 = scmp.ne.s32.totalorder %s264, %s278
      %p280 = scmp.eq.s32.totalorder %s32, 0
      %p281 = por %p279, %p280
      %s283 = sadd.s32 %s282, 1
      %p286 = scmp.eq.s32.totalorder %s26, 1
      %p287 = scmp.ne.s32.totalorder %s282, %s284
      %p288 = scmp.eq.s32.totalorder %s26, 0
      %p289 = por %p287, %p288
      %p290 = scmp.ne.s32.totalorder %s282, %s284
      %p291 = scmp.eq.s32.totalorder %s31, 1
      %p292 = por %p290, %p291
      %p293 = scmp.ne.s32.totalorder %s284, %s285
      %p294 = scmp.eq.s32.totalorder %s31, 0
      %p295 = por %p293, %p294
      %p296 = scmp.ne.s32.totalorder %s284, %s285
      %p297 = scmp.eq.s32.totalorder %s32, 1
      %p298 = por %p296, %p297
      %p300 = scmp.ne.s32.totalorder %s285, %s299
      %p301 = scmp.eq.s32.totalorder %s32, 0
      %p302 = por %p300, %p301
      %s304 = sadd.s32 %s303, 1
      %p307 = scmp.eq.s32.totalorder %s26, 1
      %p308 = scmp.ne.s32.totalorder %s303, %s305
      %p309 = scmp.eq.s32.totalorder %s26, 0
      %p310 = por %p308, %p309
      %p311 = scmp.ne.s32.totalorder %s303, %s305
      %p312 = scmp.eq.s32.totalorder %s31, 1
      %p313 = por %p311, %p312
      %p314 = scmp.ne.s32.totalorder %s305, %s306
      %p315 = scmp.eq.s32.totalorder %s31, 0
      %p316 = por %p314, %p315
      %p317 = scmp.ne.s32.totalorder %s305, %s306
      %p318 = scmp.eq.s32.totalorder %s32, 1
      %p319 = por %p317, %p318
      %p321 = scmp.ne.s32.totalorder %s306, %s320
      %p322 = scmp.eq.s32.totalorder %s32, 0
      %p323 = por %p321, %p322
      %s325 = sadd.s32 %s324, 1
      %p328 = scmp.eq.s32.totalorder %s26, 1
      %p329 = scmp.ne.s32.totalorder %s324, %s326
      %p330 = scmp.eq.s32.totalorder %s26, 0
      %p331 = por %p329, %p330
      %p332 = scmp.ne.s32.totalorder %s324, %s326
      %p333 = scmp.eq.s32.totalorder %s31, 1
      %p334 = por %p332, %p333
      %p335 = scmp.ne.s32.totalorder %s326, %s327
      %p336 = scmp.eq.s32.totalorder %s31, 0
      %p337 = por %p335, %p336
      %p338 = scmp.ne.s32.totalorder %s326, %s327
      %p339 = scmp.eq.s32.totalorder %s32, 1
      %p340 = por %p338, %p339
      %p342 = scmp.ne.s32.totalorder %s327, %s341
      %p343 = scmp.eq.s32.totalorder %s32, 0
      %p344 = por %p342, %p343
      %s346 = sadd.s32 %s345, 1
      %p349 = scmp.eq.s32.totalorder %s26, 1
      %p350 = scmp.ne.s32.totalorder %s345, %s347
      %p351 = scmp.eq.s32.totalorder %s26, 0
      %p352 = por %p350, %p351
      %p353 = scmp.ne.s32.totalorder %s345, %s347
      %p354 = scmp.eq.s32.totalorder %s31, 1
      %p355 = por %p353, %p354
      %p356 = scmp.ne.s32.totalorder %s347, %s348
      %p357 = scmp.eq.s32.totalorder %s31, 0
      %p358 = por %p356, %p357
      %p359 = scmp.ne.s32.totalorder %s347, %s348
      %p360 = scmp.eq.s32.totalorder %s32, 1
      %p361 = por %p359, %p360
      %p363 = scmp.ne.s32.totalorder %s348, %s362
      %p364 = scmp.eq.s32.totalorder %s32, 0
      %p365 = por %p363, %p364
      %s366 = ssub.s32 %s33, %s45
      %s367 = ssub.s32 %s34, %s41
      %s368 = sor.u32 %s366, %s367
      %p369 = scmp.eq.s32.totalorder %s368, 0
      %s371 = sadd.s32 %s370, 1
      %s372 = scalar_select %p369, %s370, %s371
      %p375 = pneg %p369
      %p376 = scmp.eq.s32.totalorder %s26, 1
      %p377 = por %p375, %p376
      %p378 = scmp.ne.s32.totalorder %s370, %s373
      %p379 = scmp.eq.s32.totalorder %s26, 0
      %p380 = por %p378, %p379
      %p381 = scmp.ne.s32.totalorder %s370, %s373
      %p382 = scmp.eq.s32.totalorder %s31, 1
      %p383 = por %p381, %p382
      %p384 = scmp.ne.s32.totalorder %s373, %s374
      %p385 = scmp.eq.s32.totalorder %s31, 0
      %p386 = por %p384, %p385
      %p387 = scmp.ne.s32.totalorder %s373, %s374
      %p388 = scmp.eq.s32.totalorder %s32, 1
      %p389 = por %p387, %p388
      %p391 = scmp.ne.s32.totalorder %s374, %s390
      %p392 = scmp.eq.s32.totalorder %s32, 0
      %p393 = por %p391, %p392
      %p394 = scmp.le.s32.totalorder 1, %s26
      %p395 = scmp.lt.s32.totalorder %s26, 3
      %p396 = pnand %p394, %p395
      %p397 = pneg %p396
      // Predicated region
      $region9: #{tpu_custom_call.1} parent=5 // pred_check
        _
      $region10: #{tpu_custom_call.1} parent=5 // pred_check_branch
        %399 = sbr.rel (%p396) target = $region12
      $region11: #{tpu_custom_call.1} parent=5 // pred_region
        %s400 = ssub.s32 %s26, 1
        // Predicated region
        $region13: #{tpu_custom_call.1} parent=11 // pred_check
          %p401 = pneg %p85
        $region14: #{tpu_custom_call.1} parent=11 // pred_check_branch
          %403 = sbr.rel (%p401) target = $region16
        $region15: #{tpu_custom_call.1} parent=11 // pred_region
          _
        $region16: #{tpu_custom_call.1} parent=11 // pred_fallthru
          _
        // Predicated region
        $region17: #{tpu_custom_call.1} parent=11 // pred_check
          %p404 = pneg %p106
        $region18: #{tpu_custom_call.1} parent=11 // pred_check_branch
          %406 = sbr.rel (%p404) target = $region20
        $region19: #{tpu_custom_call.1} parent=11 // pred_region
          _
        $region20: #{tpu_custom_call.1} parent=11 // pred_fallthru
          _
        // Predicated region
        $region21: #{tpu_custom_call.1} parent=11 // pred_check
          %p407 = pneg %p127
        $region22: #{tpu_custom_call.1} parent=11 // pred_check_branch
          %409 = sbr.rel (%p407) target = $region24
        $region23: #{tpu_custom_call.1} parent=11 // pred_region
          _
        $region24: #{tpu_custom_call.1} parent=11 // pred_fallthru
          _
        // Predicated region
        $region25: #{tpu_custom_call.1} parent=11 // pred_check
          %p410 = pneg %p148
        $region26: #{tpu_custom_call.1} parent=11 // pred_check_branch
          %412 = sbr.rel (%p410) target = $region28
        $region27: #{tpu_custom_call.1} parent=11 // pred_region
          _
        $region28: #{tpu_custom_call.1} parent=11 // pred_fallthru
          _
        // Predicated region
        $region29: #{tpu_custom_call.1} parent=11 // pred_check
          %p413 = pneg %p169
        $region30: #{tpu_custom_call.1} parent=11 // pred_check_branch
          %415 = sbr.rel (%p413) target = $region32
        $region31: #{tpu_custom_call.1} parent=11 // pred_region
          %417 = vsyncadd [#allocation6], 0
          %s418 = sshll.u32 %s5, 4
          %s419 = int_to_ptr.hbm [resolvable:$true] %s418
          %s420 = sshll.u32 [#allocation5], 4
          %s421 = int_to_ptr.vmem [resolvable:$true] %s420
          %426 = dma.hbm_to_vmem [thread:$0]  %s419, 256, %s421, [#allocation6], 64, 64, 4
        $region32: #{tpu_custom_call.1} parent=11 // pred_fallthru
          _
        // Predicated region
        $region33: #{tpu_custom_call.1} parent=11 // pred_check
          %p427 = pneg %p190
        $region34: #{tpu_custom_call.1} parent=11 // pred_check_branch
          %429 = sbr.rel (%p427) target = $region36
        $region35: #{tpu_custom_call.1} parent=11 // pred_region
          _
        $region36: #{tpu_custom_call.1} parent=11 // pred_fallthru
          _
        // Predicated region
        $region37: #{tpu_custom_call.1} parent=11 // pred_check
          %p430 = pneg %p211
        $region38: #{tpu_custom_call.1} parent=11 // pred_check_branch
          %432 = sbr.rel (%p430) target = $region40
        $region39: #{tpu_custom_call.1} parent=11 // pred_region
          _
        $region40: #{tpu_custom_call.1} parent=11 // pred_fallthru
          _
        // Predicated region
        $region41: #{tpu_custom_call.1} parent=11 // pred_check
          %p433 = pneg %p232
        $region42: #{tpu_custom_call.1} parent=11 // pred_check_branch
          %435 = sbr.rel (%p433) target = $region44
        $region43: #{tpu_custom_call.1} parent=11 // pred_region
          _
        $region44: #{tpu_custom_call.1} parent=11 // pred_fallthru
          _
        // Predicated region
        $region45: #{tpu_custom_call.1} parent=11 // pred_check
          %p436 = pneg %p253
        $region46: #{tpu_custom_call.1} parent=11 // pred_check_branch
          %438 = sbr.rel (%p436) target = $region48
        $region47: #{tpu_custom_call.1} parent=11 // pred_region
          _
        $region48: #{tpu_custom_call.1} parent=11 // pred_fallthru
          _
        // Predicated region
        $region49: #{tpu_custom_call.1} parent=11 // pred_check
          %p439 = pneg %p274
        $region50: #{tpu_custom_call.1} parent=11 // pred_check_branch
          %441 = sbr.rel (%p439) target = $region52
        $region51: #{tpu_custom_call.1} parent=11 // pred_region
          _
        $region52: #{tpu_custom_call.1} parent=11 // pred_fallthru
          _
        // Predicated region
        $region53: #{tpu_custom_call.1} parent=11 // pred_check
          %p442 = pneg %p295
        $region54: #{tpu_custom_call.1} parent=11 // pred_check_branch
          %444 = sbr.rel (%p442) target = $region56
        $region55: #{tpu_custom_call.1} parent=11 // pred_region
          %446 = vsyncadd [#allocation9], 0
          %s447 = sshll.u32 %s11, 4
          %s448 = int_to_ptr.hbm [resolvable:$true] %s447
          %s449 = sshll.u32 [#allocation8], 4
          %s450 = int_to_ptr.vmem [resolvable:$true] %s449
          %455 = dma.hbm_to_vmem [thread:$0]  %s448, 256, %s450, [#allocation9], 64, 64, 4
        $region56: #{tpu_custom_call.1} parent=11 // pred_fallthru
          _
        // Predicated region
        $region57: #{tpu_custom_call.1} parent=11 // pred_check
          %p456 = pneg %p316
        $region58: #{tpu_custom_call.1} parent=11 // pred_check_branch
          %458 = sbr.rel (%p456) target = $region60
        $region59: #{tpu_custom_call.1} parent=11 // pred_region
          _
        $region60: #{tpu_custom_call.1} parent=11 // pred_fallthru
          _
        // Predicated region
        $region61: #{tpu_custom_call.1} parent=11 // pred_check
          %p459 = pneg %p337
        $region62: #{tpu_custom_call.1} parent=11 // pred_check_branch
          %461 = sbr.rel (%p459) target = $region64
        $region63: #{tpu_custom_call.1} parent=11 // pred_region
          _
        $region64: #{tpu_custom_call.1} parent=11 // pred_fallthru
          _
        // Predicated region
        $region65: #{tpu_custom_call.1} parent=11 // pred_check
          %p462 = pneg %p358
        $region66: #{tpu_custom_call.1} parent=11 // pred_check_branch
          %464 = sbr.rel (%p462) target = $region68
        $region67: #{tpu_custom_call.1} parent=11 // pred_region
          _
        $region68: #{tpu_custom_call.1} parent=11 // pred_fallthru
          _
      $region12: #{tpu_custom_call.1} parent=5 // pred_fallthru
        _
      %p465 = scmp.lt.s32.totalorder %s26, 2
      // Predicated region
      $region69: #{tpu_custom_call.1} parent=5 // pred_check
        %p466 = pneg %p465
      $region70: #{tpu_custom_call.1} parent=5 // pred_check_branch
        %468 = sbr.rel (%p466) target = $region72
      $region71: #{tpu_custom_call.1} parent=5 // pred_region
        // Predicated region
        $region73: #{tpu_custom_call.1} parent=71 // pred_check
          %p469 = pneg %p58
        $region74: #{tpu_custom_call.1} parent=71 // pred_check_branch
          %471 = sbr.rel (%p469) target = $region76
        $region75: #{tpu_custom_call.1} parent=71 // pred_region
          %p472 = scmp.lt.s32.totalorder %s33, 1
          %s473 = scalar_select %p472, %s33, 1
          %s474 = smul.addr %s473, 8
          %s475 = scalar_lea.vmem %s0, %s474
        $region76: #{tpu_custom_call.1} parent=71 // pred_fallthru
          _
      $region72: #{tpu_custom_call.1} parent=5 // pred_fallthru
        _
      %p476 = scmp.le.s32.totalorder 1, %s26
      %p477 = scmp.lt.s32.totalorder %s26, 3
      %p478 = pnand %p476, %p477
      %p479 = pneg %p478
      // Predicated region
      $region77: #{tpu_custom_call.1} parent=5 // pred_check
        _
      $region78: #{tpu_custom_call.1} parent=5 // pred_check_branch
        %481 = sbr.rel (%p478) target = $region80
      $region79: #{tpu_custom_call.1} parent=5 // pred_region
        %s482 = ssub.s32 %s26, 1
        // Predicated region
        $region81: #{tpu_custom_call.1} parent=79 // pred_check
          %p483 = pneg %p169
        $region82: #{tpu_custom_call.1} parent=79 // pred_check_branch
          %485 = sbr.rel (%p483) target = $region84
        $region83: #{tpu_custom_call.1} parent=79 // pred_region
          %487 = dma.done [#allocation6], 256
        $region84: #{tpu_custom_call.1} parent=79 // pred_fallthru
          _
        // Predicated region
        $region85: #{tpu_custom_call.1} parent=79 // pred_check
          %p488 = pneg %p295
        $region86: #{tpu_custom_call.1} parent=79 // pred_check_branch
          %490 = sbr.rel (%p488) target = $region88
        $region87: #{tpu_custom_call.1} parent=79 // pred_region
          %492 = dma.done [#allocation9], 256
        $region88: #{tpu_custom_call.1} parent=79 // pred_fallthru
          _
        %p493 = scmp.lt.s32.totalorder %s35, 1
        %s494 = scalar_select %p493, %s35, 1
        %s495 = smul.addr %s494, 8
        %s496 = scalar_lea.vmem %s0, %s495
        %p497 = pneg %p64
        %p498 = pneg %p61
        %p499 = pneg %p85
        %p500 = pneg %p82
        %p501 = pneg %p106
        %p502 = pneg %p103
        %p503 = pneg %p127
        %p504 = pneg %p124
        %p505 = pneg %p148
        %p506 = pneg %p145
        %p507 = pneg %p169
        %p508 = pneg %p166
        %p509 = pneg %p190
        %p510 = pneg %p187
        %p511 = pneg %p211
        %p512 = pneg %p208
        %p513 = pneg %p232
        %p514 = pneg %p229
        %p515 = pneg %p253
        %p516 = pneg %p250
        %p517 = pneg %p274
        %p518 = pneg %p271
        %p519 = pneg %p295
        %p520 = pneg %p292
        %p521 = pneg %p316
        %p522 = pneg %p313
        %p523 = pneg %p337
        %p524 = pneg %p334
        %p525 = pneg %p358
        %p526 = pneg %p355
        %p527 = pneg %p386
        %p528 = pneg %p383
        %s529 = sand.u32 %s373, 1
        %s530 = scalar_lea.sflag [#allocation7], %s529
        %s531 = sand.u32 %s373, 1
        %s532 = smul.addr %s531, 8
        %s533 = scalar_lea.vmem [#allocation10], %s532
        %p534 = scmp.lt.s32.totalorder %s35, 1
        %s535 = scalar_select %p534, %s35, 1
        %s536 = smul.addr %s535, 8
        %s537 = scalar_lea.vmem %s0, %s536
        %p539 = scmp.eq.s32.totalorder %s36, 0
        // Predicated region
        $region89: #{tpu_custom_call.1} parent=79 // pred_check
          %p540 = pneg %p539
        $region90: #{tpu_custom_call.1} parent=79 // pred_check_branch
          %542 = sbr.rel (%p540) target = $region92
        $region91: #{tpu_custom_call.1} parent=79 // pred_region
          %v543 = vld [vmem:[%s537] sm:$0xff]
          %v544 = vpack.c.bf16 %v543, %v543
          %v545 = vld [vmem:[%s3] sm:$0xf]
          %v546 = vld [vmem:[%s3 + $0x4] sm:$0xf]
          %v547 = vld [vmem:[%s3 + $0x8] sm:$0xf]
          %v548 = vld [vmem:[%s3 + $0xc] sm:$0xf]
          %v549 = vld [vmem:[%s4] sm:$0x1]
          %v551 = vperm.slane %v549, 0
          %v557 = vunpack.c.l.b16 %v545
          %v558 = vunpack.c.l.b16 %v546
          %v559 = vunpack.c.l.b16 %v547
          %v560 = vunpack.c.l.b16 %v548
          %v561 = vpack.c.b16 %v558, %v557
          %v562 = vpack.c.b16 %v560, %v559
          %vm565 = vcmask 261120
          %v567 = vsel %vm565, %v544, 0
          %569 = vmatpush.bf16.msra.mxu0 0
          %570 = vmatpush.bf16.msra.mxu0 0
          %571 = vmatpush.bf16.msra.mxu0 0
          %572 = vmatpush.bf16.msra.mxu0 0
          %573 = vmatpush.bf16.msra.mxu0 0
          %574 = vmatpush.bf16.msra.mxu0 0
          %575 = vmatpush.bf16.msra.mxu0 %v562
          %576 = vmatpush.bf16.msra.mxu0 %v561
          %577 = vmatmul.bf16.gmra.mxu0 %v567
          %v578 = vpop.f32.mrf.mxu0
          %v579 = vadd.f32 %v551, %v578
          %v580 = vpop.f32.mrf.mxu0
          %581 = vdwg.mxu0
          %v582 = vpack.c.bf16 %v579, %v579
          %vm583 = vcmask 257024
          %584 = vst.msk [vmem:[#allocation2] sm:$0xf] %vm583, %v582
          %586 = vrot.lane.b32.xlu0 %v582, 96
          %v587 = vpop.permute.xlu0 %586
          %589 = vst.msk [vmem:[#allocation3] sm:$0xf] %vm583, %v587
        $region92: #{tpu_custom_call.1} parent=79 // pred_fallthru
          _
        %s590 = smul.u32 %s36, 8
        %s591 = scalar_lea.vmem %s537, %s590
        %v592 = vld [vmem:[%s591] sm:$0xff]
        %v593 = vpack.c.bf16 %v592, %v592
        %v594 = vld [vmem:[%s1] sm:$0xf]
        %v595 = vld [vmem:[%s1 + $0x4] sm:$0xf]
        %v596 = vld [vmem:[%s1 + $0x8] sm:$0xf]
        %v597 = vld [vmem:[%s1 + $0xc] sm:$0xf]
        %v598 = vld [vmem:[%s2] sm:$0x1]
        %v600 = vperm.slane %v598, 0
        %v606 = vunpack.c.l.b16 %v594
        %v607 = vunpack.c.l.b16 %v595
        %v608 = vunpack.c.l.b16 %v596
        %v609 = vunpack.c.l.b16 %v597
        %v610 = vpack.c.b16 %v607, %v606
        %v611 = vpack.c.b16 %v609, %v608
        %vm614 = vcmask 261120
        %v616 = vsel %vm614, %v593, 0
        %618 = vmatpush.bf16.msra.mxu0 0
        %619 = vmatpush.bf16.msra.mxu0 0
        %620 = vmatpush.bf16.msra.mxu0 0
        %621 = vmatpush.bf16.msra.mxu0 0
        %622 = vmatpush.bf16.msra.mxu0 0
        %623 = vmatpush.bf16.msra.mxu0 0
        %624 = vmatpush.bf16.msra.mxu0 %v611
        %625 = vmatpush.bf16.msra.mxu0 %v610
        %626 = vmatmul.bf16.gmra.mxu0 %v616
        %v627 = vpop.f32.mrf.mxu0
        %v628 = vadd.f32 %v600, %v627
        %v629 = vpop.f32.mrf.mxu0
        %630 = vdwg.mxu0
        %v631 = vmul.f32 %v628, 0.35355338
        %v632 = vpack.c.bf16 %v631, %v631
        %v633 = vld [vmem:[#allocation2] sm:$0xf]
        %v634 = vld [vmem:[#allocation3] sm:$0xf]
        %vm635 = vcmask 64512
        %v637 = vsel %vm635, %v632, 0
        %v640 = vsel %vm635, %v633, 0
        %642 = vmatpush.bf16.xpose.msra.mxu0 0
        %643 = vmatpush.bf16.xpose.msra.mxu0 0
        %644 = vmatpush.bf16.xpose.msra.mxu0 0
        %645 = vmatpush.bf16.xpose.msra.mxu0 0
        %646 = vmatpush.bf16.xpose.msra.mxu0 0
        %647 = vmatpush.bf16.xpose.msra.mxu0 0
        %648 = vmatpush.bf16.xpose.msra.mxu0 0
        %649 = vmatpush.bf16.xpose.msra.mxu0 %v640
        %650 = vmatmul.bf16.gmra.mxu0 %v637
        %v651 = vpop.f32.mrf.mxu0
        %v652 = vadd.f32 0.0, %v651
        %v653 = vpop.f32.mrf.mxu0
        %654 = vdwg.mxu0
        %v655 = vsel %vm635, %v652, -inf
        %656 = vmax.xlane.f32.xlu0 %v655
        %v657 = vpop.xlane.xlu0 %656
        %v658 = vsub.f32 %v652, %v657
        %v659 = vmul.f32 %v658, 1.442695
        %v660 = vpow.pop %v659
        %v661 = vsel %vm635, %v660, 0.0
        %662 = vadd.xlane.f32.xlu0 %v661
        %v663 = vpop.xlane.xlu0 %662
        %v664 = vrcp.pop %v663
        %v665 = vmul.f32 %v660, %v664
        %v666 = vpack.c.bf16 %v665, %v665
        %v668 = vsel %vm635, %v666, 0
        %vm670 = vcmask 1043456
        %v672 = vsel %vm670, %v634, 0
        %674 = vmatpush.bf16.msra.mxu0 0
        %675 = vmatpush.bf16.msra.mxu0 0
        %676 = vmatpush.bf16.msra.mxu0 0
        %677 = vmatpush.bf16.msra.mxu0 0
        %678 = vmatpush.bf16.msra.mxu0 0
        %679 = vmatpush.bf16.msra.mxu0 0
        %680 = vmatpush.bf16.msra.mxu0 0
        %681 = vmatpush.bf16.msra.mxu0 %v672
        %682 = vmatmul.bf16.gmra.mxu0 %v668
        %v683 = vpop.f32.mrf.mxu0
        %v684 = vadd.f32 0.0, %v683
        %v685 = vpop.f32.mrf.mxu0
        %686 = vdwg.mxu0
        %v687 = vpack.c.bf16 %v684, %v684
        %vm688 = vcmask 60416
        %689 = vst.msk [vmem:[#allocation4] sm:$0xf] %vm688, %v687
        %v691 = vunpack.c.l.b16 %v632
        %v692 = vpack.c.b16 %v691, %v691
        %693 = vrot.lane.b32.xlu0 %v692, 120
        %v694 = vpop.permute.xlu0 %693
        %v696 = vunpack.c.l.b16 %v633
        %v697 = vpack.c.b16 %v696, %v696
        %698 = vrot.lane.b32.xlu0 %v697, 120
        %v699 = vpop.permute.xlu0 %698
        %v701 = vsel %vm635, %v694, 0
        %v704 = vsel %vm635, %v699, 0
        %706 = vmatpush.bf16.xpose.msra.mxu0 0
        %707 = vmatpush.bf16.xpose.msra.mxu0 0
        %708 = vmatpush.bf16.xpose.msra.mxu0 0
        %709 = vmatpush.bf16.xpose.msra.mxu0 0
        %710 = vmatpush.bf16.xpose.msra.mxu0 0
        %711 = vmatpush.bf16.xpose.msra.mxu0 0
        %712 = vmatpush.bf16.xpose.msra.mxu0 0
        %713 = vmatpush.bf16.xpose.msra.mxu0 %v704
        %714 = vmatmul.bf16.gmra.mxu0 %v701
        %v715 = vpop.f32.mrf.mxu0
        %v716 = vadd.f32 0.0, %v715
        %v717 = vpop.f32.mrf.mxu0
        %718 = vdwg.mxu0
        %v719 = vsel %vm635, %v716, -inf
        %720 = vmax.xlane.f32.xlu0 %v719
        %v721 = vpop.xlane.xlu0 %720
        %v722 = vsub.f32 %v716, %v721
        %v723 = vmul.f32 %v722, 1.442695
        %v724 = vpow.pop %v723
        %v725 = vsel %vm635, %v724, 0.0
        %726 = vadd.xlane.f32.xlu0 %v725
        %v727 = vpop.xlane.xlu0 %726
        %v728 = vrcp.pop %v727
        %v729 = vmul.f32 %v724, %v728
        %v730 = vpack.c.bf16 %v729, %v729
        %v732 = vunpack.c.l.b16 %v634
        %v733 = vpack.c.b16 %v732, %v732
        %734 = vrot.lane.b32.xlu0 %v733, 120
        %v735 = vpop.permute.xlu0 %734
        %v737 = vsel %vm635, %v730, 0
        %v740 = vsel %vm670, %v735, 0
        %742 = vmatpush.bf16.msra.mxu0 0
        %743 = vmatpush.bf16.msra.mxu0 0
        %744 = vmatpush.bf16.msra.mxu0 0
        %745 = vmatpush.bf16.msra.mxu0 0
        %746 = vmatpush.bf16.msra.mxu0 0
        %747 = vmatpush.bf16.msra.mxu0 0
        %748 = vmatpush.bf16.msra.mxu0 0
        %749 = vmatpush.bf16.msra.mxu0 %v740
        %750 = vmatmul.bf16.gmra.mxu0 %v737
        %v751 = vpop.f32.mrf.mxu0
        %v752 = vadd.f32 0.0, %v751
        %v753 = vpop.f32.mrf.mxu0
        %754 = vdwg.mxu0
        %v755 = vpack.c.bf16 %v752, %v752
        %757 = vrot.lane.b32.xlu0 %v755, 8
        %v758 = vpop.permute.xlu0 %757
        %vm760 = vcmask 126016
        %761 = vst.msk [vmem:[#allocation4] sm:$0xf] %vm760, %v758
        %762 = vrot.lane.b32.xlu0 %v692, 112
        %v763 = vpop.permute.xlu0 %762
        %764 = vrot.lane.b32.xlu0 %v697, 112
        %v765 = vpop.permute.xlu0 %764
        %v767 = vsel %vm635, %v763, 0
        %v770 = vsel %vm635, %v765, 0
        %772 = vmatpush.bf16.xpose.msra.mxu0 0
        %773 = vmatpush.bf16.xpose.msra.mxu0 0
        %774 = vmatpush.bf16.xpose.msra.mxu0 0
        %775 = vmatpush.bf16.xpose.msra.mxu0 0
        %776 = vmatpush.bf16.xpose.msra.mxu0 0
        %777 = vmatpush.bf16.xpose.msra.mxu0 0
        %778 = vmatpush.bf16.xpose.msra.mxu0 0
        %779 = vmatpush.bf16.xpose.msra.mxu0 %v770
        %780 = vmatmul.bf16.gmra.mxu0 %v767
        %v781 = vpop.f32.mrf.mxu0
        %v782 = vadd.f32 0.0, %v781
        %v783 = vpop.f32.mrf.mxu0
        %784 = vdwg.mxu0
        %v785 = vsel %vm635, %v782, -inf
        %786 = vmax.xlane.f32.xlu0 %v785
        %v787 = vpop.xlane.xlu0 %786
        %v788 = vsub.f32 %v782, %v787
        %v789 = vmul.f32 %v788, 1.442695
        %v790 = vpow.pop %v789
        %v791 = vsel %vm635, %v790, 0.0
        %792 = vadd.xlane.f32.xlu0 %v791
        %v793 = vpop.xlane.xlu0 %792
        %v794 = vrcp.pop %v793
        %v795 = vmul.f32 %v790, %v794
        %v796 = vpack.c.bf16 %v795, %v795
        %797 = vrot.lane.b32.xlu0 %v733, 112
        %v798 = vpop.permute.xlu0 %797
        %v800 = vsel %vm635, %v796, 0
        %v803 = vsel %vm670, %v798, 0
        %805 = vmatpush.bf16.msra.mxu0 0
        %806 = vmatpush.bf16.msra.mxu0 0
        %807 = vmatpush.bf16.msra.mxu0 0
        %808 = vmatpush.bf16.msra.mxu0 0
        %809 = vmatpush.bf16.msra.mxu0 0
        %810 = vmatpush.bf16.msra.mxu0 0
        %811 = vmatpush.bf16.msra.mxu0 0
        %812 = vmatpush.bf16.msra.mxu0 %v803
        %813 = vmatmul.bf16.gmra.mxu0 %v800
        %v814 = vpop.f32.mrf.mxu0
        %v815 = vadd.f32 0.0, %v814
        %v816 = vpop.f32.mrf.mxu0
        %817 = vdwg.mxu0
        %v818 = vpack.c.bf16 %v815, %v815
        %820 = vrot.lane.b32.xlu0 %v818, 16
        %v821 = vpop.permute.xlu0 %820
        %vm823 = vcmask 191616
        %824 = vst.msk [vmem:[#allocation4] sm:$0xf] %vm823, %v821
        %825 = vrot.lane.b32.xlu0 %v692, 104
        %v826 = vpop.permute.xlu0 %825
        %827 = vrot.lane.b32.xlu0 %v697, 104
        %v828 = vpop.permute.xlu0 %827
        %v830 = vsel %vm635, %v826, 0
        %v833 = vsel %vm635, %v828, 0
        %835 = vmatpush.bf16.xpose.msra.mxu0 0
        %836 = vmatpush.bf16.xpose.msra.mxu0 0
        %837 = vmatpush.bf16.xpose.msra.mxu0 0
        %838 = vmatpush.bf16.xpose.msra.mxu0 0
        %839 = vmatpush.bf16.xpose.msra.mxu0 0
        %840 = vmatpush.bf16.xpose.msra.mxu0 0
        %841 = vmatpush.bf16.xpose.msra.mxu0 0
        %842 = vmatpush.bf16.xpose.msra.mxu0 %v833
        %843 = vmatmul.bf16.gmra.mxu0 %v830
        %v844 = vpop.f32.mrf.mxu0
        %v845 = vadd.f32 0.0, %v844
        %v846 = vpop.f32.mrf.mxu0
        %847 = vdwg.mxu0
        %v848 = vsel %vm635, %v845, -inf
        %849 = vmax.xlane.f32.xlu0 %v848
        %v850 = vpop.xlane.xlu0 %849
        %v851 = vsub.f32 %v845, %v850
        %v852 = vmul.f32 %v851, 1.442695
        %v853 = vpow.pop %v852
        %v854 = vsel %vm635, %v853, 0.0
        %855 = vadd.xlane.f32.xlu0 %v854
        %v856 = vpop.xlane.xlu0 %855
        %v857 = vrcp.pop %v856
        %v858 = vmul.f32 %v853, %v857
        %v859 = vpack.c.bf16 %v858, %v858
        %860 = vrot.lane.b32.xlu0 %v733, 104
        %v861 = vpop.permute.xlu0 %860
        %v863 = vsel %vm635, %v859, 0
        %v866 = vsel %vm670, %v861, 0
        %868 = vmatpush.bf16.msra.mxu0 0
        %869 = vmatpush.bf16.msra.mxu0 0
        %870 = vmatpush.bf16.msra.mxu0 0
        %871 = vmatpush.bf16.msra.mxu0 0
        %872 = vmatpush.bf16.msra.mxu0 0
        %873 = vmatpush.bf16.msra.mxu0 0
        %874 = vmatpush.bf16.msra.mxu0 0
        %875 = vmatpush.bf16.msra.mxu0 %v866
        %876 = vmatmul.bf16.gmra.mxu0 %v863
        %v877 = vpop.f32.mrf.mxu0
        %v878 = vadd.f32 0.0, %v877
        %v879 = vpop.f32.mrf.mxu0
        %880 = vdwg.mxu0
        %v881 = vpack.c.bf16 %v878, %v878
        %883 = vrot.lane.b32.xlu0 %v881, 24
        %v884 = vpop.permute.xlu0 %883
        %vm886 = vcmask 257216
        %887 = vst.msk [vmem:[#allocation4] sm:$0xf] %vm886, %v884
        %v888 = vld [vmem:[#allocation4] sm:$0xf]
        %v889 = vld [vmem:[#allocation5] sm:$0xf]
        %v890 = vld [vmem:[#allocation5 + $0x4] sm:$0xf]
        %v891 = vld [vmem:[#allocation5 + $0x8] sm:$0xf]
        %v892 = vld [vmem:[#allocation5 + $0xc] sm:$0xf]
        %v893 = vld [vmem:[%s6] sm:$0x1]
        %v895 = vperm.slane %v893, 0
        %v901 = vunpack.c.l.b16 %v889
        %v902 = vunpack.c.l.b16 %v890
        %v903 = vunpack.c.l.b16 %v891
        %v904 = vunpack.c.l.b16 %v892
        %v905 = vpack.c.b16 %v902, %v901
        %v906 = vpack.c.b16 %v904, %v903
        %v910 = vsel %vm614, %v888, 0
        %912 = vmatpush.bf16.msra.mxu0 0
        %913 = vmatpush.bf16.msra.mxu0 0
        %914 = vmatpush.bf16.msra.mxu0 0
        %915 = vmatpush.bf16.msra.mxu0 0
        %916 = vmatpush.bf16.msra.mxu0 0
        %917 = vmatpush.bf16.msra.mxu0 0
        %918 = vmatpush.bf16.msra.mxu0 %v906
        %919 = vmatpush.bf16.msra.mxu0 %v905
        %920 = vmatmul.bf16.gmra.mxu0 %v910
        %v921 = vpop.f32.mrf.mxu0
        %v922 = vadd.f32 %v895, %v921
        %v923 = vpop.f32.mrf.mxu0
        %924 = vdwg.mxu0
        %v925 = vadd.f32 %v592, %v922
        %v926 = vld [vmem:[%s7] sm:$0x1]
        %v927 = vld [vmem:[%s8] sm:$0x1]
        %v928 = vsel %vm614, %v925, 0.0
        %929 = vadd.xlane.f32.xlu0 %v928
        %v930 = vpop.xlane.xlu0 %929
        %v931 = vrcp.pop 32.0
        %v932 = vmul.f32 32.0, %v931
        %v933 = vsub.f32 1.0, %v932
        %v934 = vmul.f32 %v931, %v933
        %v935 = vadd.f32 %v931, %v934
        %vm936 = vweird.f32 %v931
        %v937 = vsel %vm936, %v931, %v935
        %v938 = vmul.f32 %v930, %v937
        %v939 = vsub.f32 %v925, %v938
        %v940 = vmul.f32 %v939, %v939
        %v941 = vsel %vm614, %v940, 0.0
        %942 = vadd.xlane.f32.xlu0 %v941
        %v943 = vpop.xlane.xlu0 %942
        %v944 = vmul.f32 %v943, %v937
        %v945 = vadd.f32 %v944, 1e-05
        %v946 = vrsqrt.pop %v945
        %v947 = vmul.f32 %v946, %v945
        %v948 = vmul.f32 %v947, %v946
        %v949 = vmul.f32 0.5, %v948
        %v950 = vsub.f32 1.5, %v949
        %v951 = vmul.f32 %v946, %v950
        %vm952 = vweird.f32 %v945
        %vm953 = vweird.f32 %v946
        %vm954 = vmor %vm952, %vm953
        %v955 = vsel %vm954, %v946, %v951
        %v956 = vmul.f32 %v939, %v955
        %v958 = vperm.slane %v926, 0
        %v960 = vmul.f32 %v956, %v958
        %v962 = vperm.slane %v927, 0
        %v964 = vadd.f32 %v960, %v962
        %v965 = vpack.c.bf16 %v964, %v964
        %v966 = vld [vmem:[#allocation8] sm:$0xf]
        %v967 = vld [vmem:[#allocation8 + $0x4] sm:$0xf]
        %v968 = vld [vmem:[#allocation8 + $0x8] sm:$0xf]
        %v969 = vld [vmem:[#allocation8 + $0xc] sm:$0xf]
        %v970 = vld [vmem:[%s12] sm:$0x1]
        %v972 = vperm.slane %v970, 0
        %v978 = vunpack.c.l.b16 %v966
        %v979 = vunpack.c.l.b16 %v967
        %v980 = vunpack.c.l.b16 %v968
        %v981 = vunpack.c.l.b16 %v969
        %v982 = vpack.c.b16 %v979, %v978
        %v983 = vpack.c.b16 %v981, %v980
        %v987 = vsel %vm614, %v965, 0
        %989 = vmatpush.bf16.msra.mxu0 0
        %990 = vmatpush.bf16.msra.mxu0 0
        %991 = vmatpush.bf16.msra.mxu0 0
        %992 = vmatpush.bf16.msra.mxu0 0
        %993 = vmatpush.bf16.msra.mxu0 0
        %994 = vmatpush.bf16.msra.mxu0 0
        %995 = vmatpush.bf16.msra.mxu0 %v983
        %996 = vmatpush.bf16.msra.mxu0 %v982
        %997 = vmatmul.bf16.gmra.mxu0 %v987
        %v998 = vpop.f32.mrf.mxu0
        %v999 = vadd.f32 %v972, %v998
        %v1000 = vpop.f32.mrf.mxu0
        %1001 = vdwg.mxu0
        %v1002 = vmax.f32 %v999, 0.0
        %v1003 = vpack.c.bf16 %v1002, %v1002
        %v1004 = vld [vmem:[%s13] sm:$0xf]
        %v1005 = vld [vmem:[%s13 + $0x4] sm:$0xf]
        %v1006 = vld [vmem:[%s13 + $0x8] sm:$0xf]
        %v1007 = vld [vmem:[%s13 + $0xc] sm:$0xf]
        %v1008 = vld [vmem:[%s13 + $0x10] sm:$0xf]
        %v1009 = vld [vmem:[%s13 + $0x14] sm:$0xf]
        %v1010 = vld [vmem:[%s13 + $0x18] sm:$0xf]
        %v1011 = vld [vmem:[%s13 + $0x1c] sm:$0xf]
        %v1012 = vld [vmem:[%s14] sm:$0x1]
        %v1014 = vperm.slane %v1012, 0
        %v1024 = vunpack.c.l.b16 %v1004
        %v1025 = vunpack.c.l.b16 %v1005
        %v1026 = vunpack.c.l.b16 %v1006
        %v1027 = vunpack.c.l.b16 %v1007
        %v1028 = vunpack.c.l.b16 %v1008
        %v1029 = vunpack.c.l.b16 %v1009
        %v1030 = vunpack.c.l.b16 %v1010
        %v1031 = vunpack.c.l.b16 %v1011
        %v1032 = vpack.c.b16 %v1025, %v1024
        %v1033 = vpack.c.b16 %v1027, %v1026
        %v1034 = vpack.c.b16 %v1029, %v1028
        %v1035 = vpack.c.b16 %v1031, %v1030
        %vm1040 = vcmask 523264
        %v1042 = vsel %vm1040, %v1003, 0
        %1044 = vmatpush.bf16.msra.mxu0 0
        %1045 = vmatpush.bf16.msra.mxu0 0
        %1046 = vmatpush.bf16.msra.mxu0 0
        %1047 = vmatpush.bf16.msra.mxu0 0
        %1048 = vmatpush.bf16.msra.mxu0 %v1035
        %1049 = vmatpush.bf16.msra.mxu0 %v1034
        %1050 = vmatpush.bf16.msra.mxu0 %v1033
        %1051 = vmatpush.bf16.msra.mxu0 %v1032
        %1052 = vmatmul.bf16.gmra.mxu0 %v1042
        %v1053 = vpop.f32.mrf.mxu0
        %v1054 = vadd.f32 %v1014, %v1053
        %v1055 = vpop.f32.mrf.mxu0
        %1056 = vdwg.mxu0
        %v1057 = vadd.f32 %v964, %v1054
        %v1058 = vld [vmem:[%s9] sm:$0x1]
        %v1059 = vld [vmem:[%s10] sm:$0x1]
        %v1060 = vsel %vm614, %v1057, 0.0
        %1061 = vadd.xlane.f32.xlu0 %v1060
        %v1062 = vpop.xlane.xlu0 %1061
        %v1063 = vmul.f32 %v1062, %v937
        %v1064 = vsub.f32 %v1057, %v1063
        %v1065 = vmul.f32 %v1064, %v1064
        %v1066 = vsel %vm614, %v1065, 0.0
        %1067 = vadd.xlane.f32.xlu0 %v1066
        %v1068 = vpop.xlane.xlu0 %1067
        %v1069 = vmul.f32 %v1068, %v937
        %v1070 = vadd.f32 %v1069, 1e-05
        %v1071 = vrsqrt.pop %v1070
        %v1072 = vmul.f32 %v1071, %v1070
        %v1073 = vmul.f32 %v1072, %v1071
        %v1074 = vmul.f32 0.5, %v1073
        %v1075 = vsub.f32 1.5, %v1074
        %v1076 = vmul.f32 %v1071, %v1075
        %vm1077 = vweird.f32 %v1070
        %vm1078 = vweird.f32 %v1071
        %vm1079 = vmor %vm1077, %vm1078
        %v1080 = vsel %vm1079, %v1071, %v1076
        %v1081 = vmul.f32 %v1064, %v1080
        %v1083 = vperm.slane %v1058, 0
        %v1085 = vmul.f32 %v1081, %v1083
        %v1087 = vperm.slane %v1059, 0
        %v1089 = vadd.f32 %v1085, %v1087
        %1090 = vst.msk [vmem:[%s533] sm:$0xff] %vm614, %v1089
        %s1091 = sand.u32 %s373, 1
        %s1092 = scalar_lea.sflag [#allocation7], %s1091
        %s1093 = sand.u32 %s373, 1
        %s1094 = smul.addr %s1093, 8
        %s1095 = scalar_lea.vmem [#allocation10], %s1094
        // Predicated region
        $region93: #{tpu_custom_call.1} parent=79 // pred_check
          %p1096 = pneg %p383
        $region94: #{tpu_custom_call.1} parent=79 // pred_check_branch
          %1098 = sbr.rel (%p1096) target = $region96
        $region95: #{tpu_custom_call.1} parent=79 // pred_region
          %1100 = vsyncadd %s1092, 0
          %s1101 = sadd.s32 %s36, %s35
          %s1102 = smul.addr %s1101, 8
          %s1103 = scalar_lea.hbm %s15, %s1102
          %s1105 = sshll.u32 %s1095, 4
          %s1106 = int_to_ptr.vmem [resolvable:$true] %s1105
          %s1107 = sshll.u32 %s1103, 4
          %s1108 = int_to_ptr.hbm [resolvable:$true] %s1107
          %1110 = dma.vmem_to_hbm [thread:$0]  %s1106, 128, %s1108, %s1092
        $region96: #{tpu_custom_call.1} parent=79 // pred_fallthru
          _
      $region80: #{tpu_custom_call.1} parent=5 // pred_fallthru
        _
      %p1111 = scmp.le.s32.totalorder 2, %s26
      // Predicated region
      $region97: #{tpu_custom_call.1} parent=5 // pred_check
        %p1112 = pneg %p1111
      $region98: #{tpu_custom_call.1} parent=5 // pred_check_branch
        %1114 = sbr.rel (%p1112) target = $region100
      $region99: #{tpu_custom_call.1} parent=5 // pred_region
        %s1115 = ssub.s32 %s26, 2
        // Predicated region
        $region101: #{tpu_custom_call.1} parent=99 // pred_check
          %p1116 = pneg %p389
        $region102: #{tpu_custom_call.1} parent=99 // pred_check_branch
          %1118 = sbr.rel (%p1116) target = $region104
        $region103: #{tpu_custom_call.1} parent=99 // pred_region
          %s1119 = sand.u32 %s374, 1
          %s1120 = scalar_lea.sflag [#allocation7], %s1119
          %s1121 = sand.u32 %s374, 1
          %s1122 = smul.addr %s1121, 8
          %s1123 = scalar_lea.vmem [#allocation10], %s1122
          %1125 = dma.done %s1120, 128
        $region104: #{tpu_custom_call.1} parent=99 // pred_fallthru
          _
      $region100: #{tpu_custom_call.1} parent=5 // pred_fallthru
        _
    $region6: #{tpu_custom_call.1} parent=1 // loop_footer
      %s30 = sadd.s32 1, %s26
    $region7: #{tpu_custom_call.1} parent=1 // loop_footer_branch
      %25 = sbr.rel target = $region3
    $region8: #{tpu_custom_call.1} parent=1 // loop_exit
      _
    %1126 = vsyncpa [#allocation6], 1
    %s1127 = scalar_lea.sflag [#allocation6], 1
    %1128 = vsyncpa %s1127, 1
    %1129 = vsyncpa [#allocation9], 1
    %1130 = vsyncpa [#allocation7], 1
    %s1131 = scalar_lea.sflag [#allocation7], 1
    %1132 = vsyncpa %s1131, 1

</llo_original>
